<compile_context>
chip_gen: v5e
topology: v5e:2x2
jax: 0.10.0
libtpu: 0.0.40
codegen_flags: <defaults>
</compile_context>

<pallas_src>
import functools

import jax
import jax.numpy as jnp
from jax import lax
from jax.experimental import pallas as pl
from jax.experimental.pallas import tpu as pltpu

V_TH = 1.0      # IFNode v_threshold
V_RESET = 0.0   # IFNode v_reset (hard reset)
_PAD = 8        # row padding of the pooled-spike buffer (max |sy*7+sx| shift)


# ----------------------------------------------------------------------------
# helpers
# ----------------------------------------------------------------------------

def fold_bn(gamma, beta, mean, var, eps=1e-5):
    """General eval-mode BatchNorm fold: y*scale + bias."""
    scale = gamma / jnp.sqrt(var + eps)
    return scale, beta - mean * scale


def _quantize(x, frac_bits):
    # Quantize to a dyadic grid (values exactly representable in bf16/f32) so
    # the Pallas kernel and the pure-JAX reference hit bit-identical membrane
    # potentials; spiking nets are discontinuous at the threshold, so this
    # makes the end-to-end check deterministic and tight.
    s = float(2 ** frac_bits)
    return jnp.round(x * s) / s


def _full_spec(shape):
    n = len(shape)
    return pl.BlockSpec(shape, lambda i, n=n: (0,) * n)


# ----------------------------------------------------------------------------
# static conv: Conv2d(1->32, 3x3, pad 1, no bias) + folded BN, as im2col GEMM.
# Runs exactly once per forward, outside the time loop.
# ----------------------------------------------------------------------------

def _conv_gemm_kernel(p_ref, w_ref, scale_ref, bias_ref, o_ref):
    acc = jnp.dot(p_ref[...].astype(jnp.bfloat16),
                  w_ref[...].astype(jnp.bfloat16),
                  preferred_element_type=jnp.float32)
    o_ref[...] = acc * scale_ref[...] + bias_ref[...]


def conv_gemm(patches, w, scale, bias):
    M, K = patches.shape
    N = w.shape[1]
    return pl.pallas_call(
        _conv_gemm_kernel,
        grid=(1,),
        in_specs=[_full_spec((M, K)), _full_spec((K, N)),
                  _full_spec((1, N)), _full_spec((1, N))],
        out_specs=_full_spec((M, N)),
        out_shape=jax.ShapeDtypeStruct((M, N), jnp.float32),
    )(patches, w, scale, bias)


def im2col_3x3_same(x_nhwc):
    # 3x3 conv, stride 1, padding 1.  Patch column order is (ky, kx, cin).
    B, H, W, C = x_nhwc.shape
    xp = jnp.pad(x_nhwc, ((0, 0), (1, 1), (1, 1), (0, 0)))
    cols = []
    for dy in range(3):
        for dx in range(3):
            cols.append(xp[:, dy:dy + H, dx:dx + W, :])
    patches = jnp.stack(cols, axis=3)              # [B, H, W, 9, C]
    return patches.reshape(B * H * W, 9 * C)


# ----------------------------------------------------------------------------
# the fused spiking network: the entire T-step loop in one kernel.
#
# Layouts inside the kernel (one batch element per grid step):
#   xs_ref[0] : [4, 196, 32]   4 = 2x2 pool-window position of the 28x28 map,
#                              196 rows = q1*49 + u*7 + v where q1 is the
#                              parity class of the 14x14 pooled map and (u,v)
#                              its 7x7 within-parity coordinate, 32 channels.
#   pad_ref   : [212, 32]      pooled spikes (14x14 map in parity-block order)
#                              with _PAD zero rows on each side; the 9 conv
#                              taps are static row-shifted slices of it.
#   v1/v2/v3/v4, counter       membrane potentials / spike counter (VMEM).
# ----------------------------------------------------------------------------

def _fused_kernel(xs_ref, mask_ref, w2_ref, scale2_ref, bias2_ref,
                  w1_ref, wfc2_ref, out_ref,
                  v1_ref, pad_ref, v2_ref, feat_ref, v3_ref, v4_ref, cnt_ref,
                  *, T):
    # fresh membrane state / buffers for this batch element
    v1_ref[...] = jnp.zeros_like(v1_ref)
    v2_ref[...] = jnp.zeros_like(v2_ref)
    v3_ref[...] = jnp.zeros_like(v3_ref)
    v4_ref[...] = jnp.zeros_like(v4_ref)
    cnt_ref[...] = jnp.zeros_like(cnt_ref)
    pad_ref[...] = jnp.zeros_like(pad_ref)   # borders must stay zero

    xs = xs_ref[0]                                        # [4, 196, 32]

    def step(t, carry):
        # ---- IF #1 on the 28x28 map (stored as 4 pool-window slices) -------
        v1 = v1_ref[...] + xs
        spk1 = v1 >= V_TH
        v1_ref[...] = jnp.where(spk1, V_RESET, v1)
        s1 = spk1.astype(jnp.float32)
        # ---- MaxPool 2x2 #1: max over the 4 window positions ---------------
        s1p = jnp.maximum(jnp.maximum(s1[0], s1[1]),
                          jnp.maximum(s1[2], s1[3]))      # [196, 32]
        pad_ref[_PAD:_PAD + 196, :] = s1p
        # ---- Conv2d(32->32, 3x3, pad 1) + BN + IF #2 + MaxPool 2x2 #2 ------
        pooled = None
        for q2 in range(4):                # parity class of the output pixel
            py, px = q2 >> 1, q2 & 1
            acc = jnp.zeros((49, 32), jnp.float32)
            for ky in range(3):
                for kx in range(3):
                    yy, xx = py + ky - 1, px + kx - 1
                    q1 = (yy & 1) * 2 + (xx & 1)          # input parity block
                    sy, sx = yy >> 1, xx >> 1             # shift on 7x7 grid
                    start = _PAD + q1 * 49 + sy * 7 + sx
                    m = mask_ref[(sy + 1) * 3 + (sx + 1)]           # [49, 1]
                    operand = pad_ref[start:start + 49, :] * m      # [49, 32]
                    acc = acc + jnp.dot(operand.astype(jnp.bfloat16),
                                        w2_ref[ky * 3 + kx],
                                        preferred_element_type=jnp.float32)
            y2 = acc * scale2_ref[...] + bias2_ref[...]
            v2q = v2_ref[q2] + y2
            spk2 = v2q >= V_TH
            v2_ref[q2] = jnp.where(spk2, V_RESET, v2q)
            s2 = spk2.astype(jnp.float32)
            pooled = s2 if pooled is None else jnp.maximum(pooled, s2)
        # ---- Flatten (NHWC order; fc1 weight rows were pre-permuted) -------
        for s in range(49):
            feat_ref[:, s * 32:(s + 1) * 32] = pooled[s:s + 1, :]
        # ---- Linear(1568->512) -> IF #3 -> Linear(512->10) -> IF #4 --------
        h = jnp.dot(feat_ref[...].astype(jnp.bfloat16), w1_ref[...],
                    preferred_element_type=jnp.float32)             # [1, 512]
        v3 = v3_ref[...] + h
        spk3 = v3 >= V_TH
        v3_ref[...] = jnp.where(spk3, V_RESET, v3)
        o = jnp.dot(spk3.astype(jnp.bfloat16), wfc2_ref[...],
                    preferred_element_type=jnp.float32)             # [1, 10]
        v4 = v4_ref[...] + o
        spk4 = v4 >= V_TH
        v4_ref[...] = jnp.where(spk4, V_RESET, v4)
        cnt_ref[...] = cnt_ref[...] + spk4.astype(jnp.float32)
        return carry

    lax.fori_loop(0, T, step, 0)
    out_ref[0] = cnt_ref[...] * (1.0 / T)


def fused_snn(xs_arr, masks, w2k, scale2, bias2, w1p, wfc2, T):
    B = xs_arr.shape[0]
    out = pl.pallas_call(
        functools.partial(_fused_kernel, T=T),
        grid=(B,),
        in_specs=[
            pl.BlockSpec((1, 4, 196, 32), lambda i: (i, 0, 0, 0)),  # xs
            pl.BlockSpec((9, 49, 1), lambda i: (0, 0, 0)),          # masks
            pl.BlockSpec((9, 32, 32), lambda i: (0, 0, 0)),         # conv2 w
            pl.BlockSpec((1, 32), lambda i: (0, 0)),                # scale2
            pl.BlockSpec((1, 32), lambda i: (0, 0)),                # bias2
            pl.BlockSpec((1568, 512), lambda i: (0, 0)),            # fc1 w
            pl.BlockSpec((512, 10), lambda i: (0, 0)),              # fc2 w
        ],
        out_specs=pl.BlockSpec((1, 1, 10), lambda i: (i, 0, 0)),
        out_shape=jax.ShapeDtypeStruct((B, 1, 10), jnp.float32),
        scratch_shapes=[
            pltpu.VMEM((4, 196, 32), jnp.float32),          # v1
            pltpu.VMEM((196 + 2 * _PAD, 32), jnp.float32),  # padded pooled spikes
            pltpu.VMEM((4, 49, 32), jnp.float32),           # v2
            pltpu.VMEM((1, 1568), jnp.float32),             # flattened features
            pltpu.VMEM((1, 512), jnp.float32),              # v3
            pltpu.VMEM((1, 10), jnp.float32),               # v4
            pltpu.VMEM((1, 10), jnp.float32),               # spike counter
        ],
        compiler_params=pltpu.CompilerParams(
            dimension_semantics=("parallel",)),
    )(xs_arr, masks, w2k, scale2, bias2, w1p, wfc2)
    return out.reshape(B, 10)


def _conv_shift_masks():
    # mask[(sy+1)*3+(sx+1), r] = 1 iff the shifted 7x7 coordinate is in-bounds
    r = jnp.arange(49)
    oh, ow = r // 7, r % 7
    rows = []
    for sy in (-1, 0, 1):
        for sx in (-1, 0, 1):
            ok = ((oh + sy >= 0) & (oh + sy < 7) &
                  (ow + sx >= 0) & (ow + sx < 7))
            rows.append(ok.astype(jnp.float32))
    return jnp.stack(rows, axis=0).reshape(9, 49, 1)


# ----------------------------------------------------------------------------
# model forward
# ----------------------------------------------------------------------------

def model2_forward(x_nchw, params, T):
    B = x_nchw.shape[0]
    x = jnp.transpose(x_nchw, (0, 2, 3, 1)).astype(jnp.float32)  # [B,28,28,1]

    scale1, bias1 = fold_bn(params["bn1_g"], params["bn1_b"],
                            params["bn1_mean"], params["bn1_var"])
    scale2, bias2 = fold_bn(params["bn2_g"], params["bn2_b"],
                            params["bn2_mean"], params["bn2_var"])

    # static conv (time-step independent): one im2col GEMM outside the T loop
    p1 = im2col_3x3_same(x)                                       # [B*784, 9]
    xs = conv_gemm(p1, params["w1"].reshape(9, 32),
                   scale1.reshape(1, 32), bias1.reshape(1, 32))   # [B*784, 32]
    xs = xs.reshape(B, 28, 28, 32)

    # one-time relayout to (batch, pool-window, parity-block*7*7, channel)
    xs_arr = (xs.reshape(B, 7, 2, 2, 7, 2, 2, 32)
                .transpose(0, 3, 6, 2, 5, 1, 4, 7)
                .reshape(B, 4, 196, 32))

    # fc1 weight rows: PyTorch NCHW-flatten order -> our NHWC-flatten order
    w1p = (params["fc_w1"].reshape(32, 49, 512)
           .transpose(1, 0, 2)
           .reshape(1568, 512)).astype(jnp.bfloat16)
    w2k = params["w2"].reshape(9, 32, 32).astype(jnp.bfloat16)
    wfc2 = params["fc_w2"].astype(jnp.bfloat16)
    masks = _conv_shift_masks()

    return fused_snn(xs_arr, masks, w2k,
                     scale2.reshape(1, 32), bias2.reshape(1, 32),
                     w1p, wfc2, T)


# ----------------------------------------------------------------------------
# parameters (quantized to bf16-exact dyadic grids for a deterministic check)
# ----------------------------------------------------------------------------

def init_params(key):
    ks = jax.random.split(key, 12)
    w1 = _quantize(jax.random.normal(ks[0], (3, 3, 1, 32), jnp.float32) * 0.3, 6)
    bn1_g = jax.random.uniform(ks[1], (32,), jnp.float32, 0.5, 1.5)
    bn1_b = jax.random.normal(ks[2], (32,), jnp.float32) * 0.1
    bn1_mean = jax.random.normal(ks[3], (32,), jnp.float32) * 0.1
    bn1_var = jax.random.uniform(ks[4], (32,), jnp.float32, 0.5, 1.5)
    w2 = _quantize(jax.random.normal(ks[5], (3, 3, 32, 32), jnp.float32) * 0.1, 6)
    bn2_g = jax.random.uniform(ks[6], (32,), jnp.float32, 0.5, 1.5)
    bn2_b = jax.random.normal(ks[7], (32,), jnp.float32) * 0.1
    bn2_mean = jax.random.normal(ks[8], (32,), jnp.float32) * 0.1
    bn2_var = jax.random.uniform(ks[9], (32,), jnp.float32, 0.5, 1.5)
    fc_w1 = _quantize(
        jax.random.normal(ks[10], (32 * 7 * 7, 32 * 4 * 4), jnp.float32) * 0.05, 9)
    fc_w2 = _quantize(
        jax.random.normal(ks[11], (32 * 4 * 4, 10), jnp.float32) * 0.1, 8)
    return dict(w1=w1, bn1_g=bn1_g, bn1_b=bn1_b, bn1_mean=bn1_mean, bn1_var=bn1_var,
                w2=w2, bn2_g=bn2_g, bn2_b=bn2_b, bn2_mean=bn2_mean, bn2_var=bn2_var,
                fc_w1=fc_w1, fc_w2=fc_w2)


# ----------------------------------------------------------------------------
# pure-JAX reference (lax.conv / reduce_window / plain matmuls)
# ----------------------------------------------------------------------------

def reference_forward(x_nchw, params, T):
    x = jnp.transpose(x_nchw, (0, 2, 3, 1)).astype(jnp.float32)
    B = x.shape[0]
    scale1, bias1 = fold_bn(params["bn1_g"], params["bn1_b"],
                            params["bn1_mean"], params["bn1_var"])
    scale2, bias2 = fold_bn(params["bn2_g"], params["bn2_b"],
                            params["bn2_mean"], params["bn2_var"])

    def conv_bn(z, w, scale, bias):
        y = lax.conv_general_dilated(
            z, w, (1, 1), "SAME", dimension_numbers=("NHWC", "HWIO", "NHWC"))
        return y * scale + bias

    def pool(z):
        return lax.reduce_window(z, -jnp.inf, lax.max,
                                 (1, 2, 2, 1), (1, 2, 2, 1), "VALID")

    def if_step(inp, v):
        v = v + inp
        s = (v >= V_TH).astype(jnp.float32)
        return s, jnp.where(v >= V_TH, V_RESET, v)

    xs = conv_bn(x, params["w1"], scale1, bias1)
    v1 = jnp.zeros_like(xs)
    v2 = jnp.zeros((B, 14, 14, 32), jnp.float32)
    v3 = jnp.zeros((B, 512), jnp.float32)
    v4 = jnp.zeros((B, 10), jnp.float32)
    counter = jnp.zeros((B, 10), jnp.float32)
    for _ in range(T):
        s1, v1 = if_step(xs, v1)
        s2, v2 = if_step(conv_bn(pool(s1), params["w2"], scale2, bias2), v2)
        feat = jnp.transpose(pool(s2), (0, 3, 1, 2)).reshape(B, -1)  # NCHW flatten
        h, v3 = if_step(feat @ params["fc_w1"], v3)
        o, v4 = if_step(h @ params["fc_w2"], v4)
        counter = counter + o
    return counter / T


# ----------------------------------------------------------------------------
# main
# ----------------------------------------------------------------------------

if __name__ == "__main__":
    key = jax.random.PRNGKey(0)
    pkey, xkey = jax.random.split(key)
    params = init_params(pkey)

    B, T = 2, 4
    x = _quantize(jax.random.normal(xkey, (B, 1, 28, 28), jnp.float32), 4)

    # Tight, deterministic check of the Pallas static-conv GEMM + general BN
    # fold against lax.conv with raw running statistics (no thresholds here).
    eps = 1e-5
    scale1, bias1 = fold_bn(params["bn1_g"], params["bn1_b"],
                            params["bn1_mean"], params["bn1_var"], eps)
    x_nhwc = jnp.transpose(x, (0, 2, 3, 1))
    y_pallas = conv_gemm(im2col_3x3_same(x_nhwc), params["w1"].reshape(9, 32),
                         scale1.reshape(1, 32),
                         bias1.reshape(1, 32)).reshape(B, 28, 28, 32)
    y_conv = lax.conv_general_dilated(
        x_nhwc, params["w1"], (1, 1), "SAME",
        dimension_numbers=("NHWC", "HWIO", "NHWC"))
    y_ref = ((y_conv - params["bn1_mean"]) / jnp.sqrt(params["bn1_var"] + eps)
             * params["bn1_g"] + params["bn1_b"])
    assert float(jnp.max(jnp.abs(y_pallas - y_ref))) < 1e-4

    # Fused spiking forward: the whole T-step loop is one Pallas kernel.
    fwd = jax.jit(functools.partial(model2_forward, T=T))
    out = jax.block_until_ready(fwd(x, params))
    assert out.shape == (B, 10)
    assert bool(jnp.all(jnp.isfinite(out)))
    assert bool(jnp.all((out >= 0.0) & (out <= 1.0)))

    # End-to-end check.  Inputs/weights sit on bf16-exact dyadic grids, so the
    # Pallas kernel (bf16 MXU operands, f32 accumulation) and the f32 reference
    # produce identical pre-threshold membrane potentials; the tolerances below
    # only allow a stray borderline spike flip while still catching real bugs.
    ref = jax.block_until_ready(reference_forward(x, params, T))
    diff = jnp.abs(out - ref)
    assert float(jnp.max(diff)) <= 0.5 + 1e-6
    assert float(jnp.mean(diff)) <= 0.05

    print("KERNEL_OK")
</pallas_src>

<mosaic_0001>
module attributes {stable_mosaic.version = 11 : i64} {
  func.func @_conv_gemm_kernel(%arg0: i32, %arg1: memref<1568x9xf32, #tpu.memory_space<vmem>>, %arg2: memref<9x32xf32, #tpu.memory_space<vmem>>, %arg3: memref<1x32xf32, #tpu.memory_space<vmem>>, %arg4: memref<1x32xf32, #tpu.memory_space<vmem>>, %arg5: memref<1568x32xf32, #tpu.memory_space<vmem>>) attributes {dimension_semantics = [#tpu.dimension_semantics<arbitrary>], iteration_bounds = array<i64: 1>, scalar_prefetch = 0 : i64, scratch_operands = 0 : i64, tpu.core_type = #tpu.core_type<tc>, window_params = [{pipeline_mode = #tpu.pipeline_mode<synchronous>, transform_indices = @transform_0, window_bounds = array<i64: 1568, 9>}, {pipeline_mode = #tpu.pipeline_mode<synchronous>, transform_indices = @transform_1, window_bounds = array<i64: 9, 32>}, {pipeline_mode = #tpu.pipeline_mode<synchronous>, transform_indices = @transform_2, window_bounds = array<i64: 1, 32>}, {pipeline_mode = #tpu.pipeline_mode<synchronous>, transform_indices = @transform_3, window_bounds = array<i64: 1, 32>}, {pipeline_mode = #tpu.pipeline_mode<synchronous>, transform_indices = @transform_4, window_bounds = array<i64: 1568, 32>}]} {
    %c0 = arith.constant 0 : index
    %c0_0 = arith.constant 0 : index
    %0 = vector.load %arg1[%c0, %c0_0] : memref<1568x9xf32, #tpu.memory_space<vmem>>, vector<1568x9xf32>
    %1 = arith.truncf %0 : vector<1568x9xf32> to vector<1568x9xbf16>
    %c0_1 = arith.constant 0 : index
    %c0_2 = arith.constant 0 : index
    %2 = vector.load %arg2[%c0_1, %c0_2] : memref<9x32xf32, #tpu.memory_space<vmem>>, vector<9x32xf32>
    %3 = arith.truncf %2 : vector<9x32xf32> to vector<9x32xbf16>
    %cst = arith.constant dense<0.000000e+00> : vector<1568x32xf32>
    %4 = tpu.matmul %1, %3, %cst {dimension_numbers = #tpu.dot_dimension_numbers<[1], [0], [0], [1], [0, 0, 1, 1], [], []>} : vector<1568x9xbf16>, vector<9x32xbf16>, vector<1568x32xf32> -> vector<1568x32xf32>
    %c0_3 = arith.constant 0 : index
    %c0_4 = arith.constant 0 : index
    %5 = vector.load %arg3[%c0_3, %c0_4] : memref<1x32xf32, #tpu.memory_space<vmem>>, vector<1x32xf32>
    %6 = vector.broadcast %5 : vector<1x32xf32> to vector<1568x32xf32>
    %7 = arith.mulf %4, %6 : vector<1568x32xf32>
    %c0_5 = arith.constant 0 : index
    %c0_6 = arith.constant 0 : index
    %8 = vector.load %arg4[%c0_5, %c0_6] : memref<1x32xf32, #tpu.memory_space<vmem>>, vector<1x32xf32>
    %9 = vector.broadcast %8 : vector<1x32xf32> to vector<1568x32xf32>
    %10 = arith.addf %7, %9 : vector<1568x32xf32>
    %c0_7 = arith.constant 0 : index
    %c0_8 = arith.constant 0 : index
    %11 = vector.load %arg5[%c0_7, %c0_8] : memref<1568x32xf32, #tpu.memory_space<vmem>>, vector<1568x32xf32>
    tpu.vector_store %arg5[%c0_7, %c0_8], %10 {strides = array<i32>} : memref<1568x32xf32, #tpu.memory_space<vmem>>, vector<1568x32xf32>,
    return
  }
  func.func @transform_0(%arg0: i32) -> (i32, i32) {
    %c0_i32 = arith.constant 0 : i32
    %c0_i32_0 = arith.constant 0 : i32
    %c0_i32_1 = arith.constant 0 : i32
    return %c0_i32, %c0_i32_0 : i32, i32
  }
  func.func @transform_1(%arg0: i32) -> (i32, i32) {
    %c0_i32 = arith.constant 0 : i32
    %c0_i32_0 = arith.constant 0 : i32
    %c0_i32_1 = arith.constant 0 : i32
    return %c0_i32, %c0_i32_0 : i32, i32
  }
  func.func @transform_2(%arg0: i32) -> (i32, i32) {
    %c0_i32 = arith.constant 0 : i32
    %c0_i32_0 = arith.constant 0 : i32
    %c0_i32_1 = arith.constant 0 : i32
    return %c0_i32, %c0_i32_0 : i32, i32
  }
  func.func @transform_3(%arg0: i32) -> (i32, i32) {
    %c0_i32 = arith.constant 0 : i32
    %c0_i32_0 = arith.constant 0 : i32
    %c0_i32_1 = arith.constant 0 : i32
    return %c0_i32, %c0_i32_0 : i32, i32
  }
  func.func @transform_4(%arg0: i32) -> (i32, i32) {
    %c0_i32 = arith.constant 0 : i32
    %c0_i32_0 = arith.constant 0 : i32
    %c0_i32_1 = arith.constant 0 : i32
    return %c0_i32, %c0_i32_0 : i32, i32
  }
}

</mosaic_0001>

<llo_original>
// kernel: tpu_custom_call.1
$region0: #{tpu_custom_call.1}
  #allocation0 [shape = 'u32[]', space=smem, size = 0x4, offset = 0x4, fixed_abs, tag = 'smem constant byte address 0x4 - core index']
  #allocation1 [shape = 'u32[72,128]{1,0:T(1,128)}', space=vmem, size = 0x9000, scoped, tag = 'internal scratch']
  %s0 = inlined_call_operand.vmem [shape: f32[1568,9], index: 0, kind: input, shape index: {}]
  %s1 = inlined_call_operand.vmem [shape: f32[9,32], index: 1, kind: input, shape index: {}]
  %s2 = inlined_call_operand.vmem [shape: f32[1,32], index: 2, kind: input, shape index: {}]
  %s3 = inlined_call_operand.vmem [shape: f32[1,32], index: 3, kind: input, shape index: {}]
  %s4 = inlined_call_operand.vmem [shape: f32[1568,32], index: 4, kind: output, shape index: {}]
  %s5 = sld [smem:[#allocation0]]
  $region26: #{tpu_custom_call.1} parent=0
    _
  %s7 = ssub.s32 1, %s5
  %s8 = scalar_select 0, %s7, %s5
  // Predicated region
  $region2: #{tpu_custom_call.1} parent=0 // pred_check
    _
  $region3: #{tpu_custom_call.1} parent=0 // pred_check_branch
    %10 = sbr.rel (0) target = $region5
  $region4: #{tpu_custom_call.1} parent=0 // pred_region
    _
  $region5: #{tpu_custom_call.1} parent=0 // pred_fallthru
    _
  // Predicated region
  $region6: #{tpu_custom_call.1} parent=0 // pred_check
    _
  $region7: #{tpu_custom_call.1} parent=0 // pred_check_branch
    %12 = sbr.rel (0) target = $region9
  $region8: #{tpu_custom_call.1} parent=0 // pred_region
    _
  $region9: #{tpu_custom_call.1} parent=0 // pred_fallthru
    _
  // Predicated region
  $region10: #{tpu_custom_call.1} parent=0 // pred_check
    _
  $region11: #{tpu_custom_call.1} parent=0 // pred_check_branch
    %14 = sbr.rel (0) target = $region13
  $region12: #{tpu_custom_call.1} parent=0 // pred_region
    _
  $region13: #{tpu_custom_call.1} parent=0 // pred_fallthru
    _
  // Predicated region
  $region14: #{tpu_custom_call.1} parent=0 // pred_check
    _
  $region15: #{tpu_custom_call.1} parent=0 // pred_check_branch
    %16 = sbr.rel (0) target = $region17
  $region16: #{tpu_custom_call.1} parent=0 // pred_region
    _
  $region17: #{tpu_custom_call.1} parent=0 // pred_fallthru
    _
  %v18 = vld [vmem:[%s0] sm:$0xff]
  %v19 = vld [vmem:[%s0 + $0x8] sm:$0xff]
  %v20 = vld [vmem:[%s0 + $0x10] sm:$0xff]
  %v21 = vld [vmem:[%s0 + $0x18] sm:$0xff]
  %v22 = vld [vmem:[%s0 + $0x20] sm:$0xff]
  %v23 = vld [vmem:[%s0 + $0x28] sm:$0xff]
  %v24 = vld [vmem:[%s0 + $0x30] sm:$0xff]
  %v25 = vld [vmem:[%s0 + $0x38] sm:$0xff]
  %v26 = vld [vmem:[%s0 + $0x40] sm:$0xff]
  %v27 = vld [vmem:[%s0 + $0x48] sm:$0xff]
  %v28 = vld [vmem:[%s0 + $0x50] sm:$0xff]
  %v29 = vld [vmem:[%s0 + $0x58] sm:$0xff]
  %v30 = vld [vmem:[%s0 + $0x60] sm:$0xff]
  %v31 = vld [vmem:[%s0 + $0x68] sm:$0xff]
  %v32 = vld [vmem:[%s0 + $0x70] sm:$0xff]
  %v33 = vld [vmem:[%s0 + $0x78] sm:$0xff]
  %v34 = vld [vmem:[%s0 + $0x80] sm:$0xff]
  %v35 = vld [vmem:[%s0 + $0x88] sm:$0xff]
  %v36 = vld [vmem:[%s0 + $0x90] sm:$0xff]
  %v37 = vld [vmem:[%s0 + $0x98] sm:$0xff]
  %v38 = vld [vmem:[%s0 + $0xa0] sm:$0xff]
  %v39 = vld [vmem:[%s0 + $0xa8] sm:$0xff]
  %v40 = vld [vmem:[%s0 + $0xb0] sm:$0xff]
  %v41 = vld [vmem:[%s0 + $0xb8] sm:$0xff]
  %v42 = vld [vmem:[%s0 + $0xc0] sm:$0xff]
  %v43 = vld [vmem:[%s0 + $0xc8] sm:$0xff]
  %v44 = vld [vmem:[%s0 + $0xd0] sm:$0xff]
  %v45 = vld [vmem:[%s0 + $0xd8] sm:$0xff]
  %v46 = vld [vmem:[%s0 + $0xe0] sm:$0xff]
  %v47 = vld [vmem:[%s0 + $0xe8] sm:$0xff]
  %v48 = vld [vmem:[%s0 + $0xf0] sm:$0xff]
  %v49 = vld [vmem:[%s0 + $0xf8] sm:$0xff]
  %v50 = vld [vmem:[%s0 + $0x100] sm:$0xff]
  %v51 = vld [vmem:[%s0 + $0x108] sm:$0xff]
  %v52 = vld [vmem:[%s0 + $0x110] sm:$0xff]
  %v53 = vld [vmem:[%s0 + $0x118] sm:$0xff]
  %v54 = vld [vmem:[%s0 + $0x120] sm:$0xff]
  %v55 = vld [vmem:[%s0 + $0x128] sm:$0xff]
  %v56 = vld [vmem:[%s0 + $0x130] sm:$0xff]
  %v57 = vld [vmem:[%s0 + $0x138] sm:$0xff]
  %v58 = vld [vmem:[%s0 + $0x140] sm:$0xff]
  %v59 = vld [vmem:[%s0 + $0x148] sm:$0xff]
  %v60 = vld [vmem:[%s0 + $0x150] sm:$0xff]
  %v61 = vld [vmem:[%s0 + $0x158] sm:$0xff]
  %v62 = vld [vmem:[%s0 + $0x160] sm:$0xff]
  %v63 = vld [vmem:[%s0 + $0x168] sm:$0xff]
  %v64 = vld [vmem:[%s0 + $0x170] sm:$0xff]
  %v65 = vld [vmem:[%s0 + $0x178] sm:$0xff]
  %v66 = vld [vmem:[%s0 + $0x180] sm:$0xff]
  %v67 = vld [vmem:[%s0 + $0x188] sm:$0xff]
  %v68 = vld [vmem:[%s0 + $0x190] sm:$0xff]
  %v69 = vld [vmem:[%s0 + $0x198] sm:$0xff]
  %v70 = vld [vmem:[%s0 + $0x1a0] sm:$0xff]
  %v71 = vld [vmem:[%s0 + $0x1a8] sm:$0xff]
  %v72 = vld [vmem:[%s0 + $0x1b0] sm:$0xff]
  %v73 = vld [vmem:[%s0 + $0x1b8] sm:$0xff]
  %v74 = vld [vmem:[%s0 + $0x1c0] sm:$0xff]
  %v75 = vld [vmem:[%s0 + $0x1c8] sm:$0xff]
  %v76 = vld [vmem:[%s0 + $0x1d0] sm:$0xff]
  %v77 = vld [vmem:[%s0 + $0x1d8] sm:$0xff]
  %v78 = vld [vmem:[%s0 + $0x1e0] sm:$0xff]
  %v79 = vld [vmem:[%s0 + $0x1e8] sm:$0xff]
  %v80 = vld [vmem:[%s0 + $0x1f0] sm:$0xff]
  %v81 = vld [vmem:[%s0 + $0x1f8] sm:$0xff]
  %v82 = vld [vmem:[%s0 + $0x200] sm:$0xff]
  %v83 = vld [vmem:[%s0 + $0x208] sm:$0xff]
  %v84 = vld [vmem:[%s0 + $0x210] sm:$0xff]
  %v85 = vld [vmem:[%s0 + $0x218] sm:$0xff]
  %v86 = vld [vmem:[%s0 + $0x220] sm:$0xff]
  %v87 = vld [vmem:[%s0 + $0x228] sm:$0xff]
  %v88 = vld [vmem:[%s0 + $0x230] sm:$0xff]
  %v89 = vld [vmem:[%s0 + $0x238] sm:$0xff]
  %v90 = vld [vmem:[%s0 + $0x240] sm:$0xff]
  %v91 = vld [vmem:[%s0 + $0x248] sm:$0xff]
  %v92 = vld [vmem:[%s0 + $0x250] sm:$0xff]
  %v93 = vld [vmem:[%s0 + $0x258] sm:$0xff]
  %v94 = vld [vmem:[%s0 + $0x260] sm:$0xff]
  %v95 = vld [vmem:[%s0 + $0x268] sm:$0xff]
  %v96 = vld [vmem:[%s0 + $0x270] sm:$0xff]
  %v97 = vld [vmem:[%s0 + $0x278] sm:$0xff]
  %v98 = vld [vmem:[%s0 + $0x280] sm:$0xff]
  %v99 = vld [vmem:[%s0 + $0x288] sm:$0xff]
  %v100 = vld [vmem:[%s0 + $0x290] sm:$0xff]
  %v101 = vld [vmem:[%s0 + $0x298] sm:$0xff]
  %v102 = vld [vmem:[%s0 + $0x2a0] sm:$0xff]
  %v103 = vld [vmem:[%s0 + $0x2a8] sm:$0xff]
  %v104 = vld [vmem:[%s0 + $0x2b0] sm:$0xff]
  %v105 = vld [vmem:[%s0 + $0x2b8] sm:$0xff]
  %v106 = vld [vmem:[%s0 + $0x2c0] sm:$0xff]
  %v107 = vld [vmem:[%s0 + $0x2c8] sm:$0xff]
  %v108 = vld [vmem:[%s0 + $0x2d0] sm:$0xff]
  %v109 = vld [vmem:[%s0 + $0x2d8] sm:$0xff]
  %v110 = vld [vmem:[%s0 + $0x2e0] sm:$0xff]
  %v111 = vld [vmem:[%s0 + $0x2e8] sm:$0xff]
  %v112 = vld [vmem:[%s0 + $0x2f0] sm:$0xff]
  %v113 = vld [vmem:[%s0 + $0x2f8] sm:$0xff]
  %v114 = vld [vmem:[%s0 + $0x300] sm:$0xff]
  %v115 = vld [vmem:[%s0 + $0x308] sm:$0xff]
  %v116 = vld [vmem:[%s0 + $0x310] sm:$0xff]
  %v117 = vld [vmem:[%s0 + $0x318] sm:$0xff]
  %v118 = vld [vmem:[%s0 + $0x320] sm:$0xff]
  %v119 = vld [vmem:[%s0 + $0x328] sm:$0xff]
  %v120 = vld [vmem:[%s0 + $0x330] sm:$0xff]
  %v121 = vld [vmem:[%s0 + $0x338] sm:$0xff]
  %v122 = vld [vmem:[%s0 + $0x340] sm:$0xff]
  %v123 = vld [vmem:[%s0 + $0x348] sm:$0xff]
  %v124 = vld [vmem:[%s0 + $0x350] sm:$0xff]
  %v125 = vld [vmem:[%s0 + $0x358] sm:$0xff]
  %v126 = vld [vmem:[%s0 + $0x360] sm:$0xff]
  %v127 = vld [vmem:[%s0 + $0x368] sm:$0xff]
  %v128 = vld [vmem:[%s0 + $0x370] sm:$0xff]
  %v129 = vld [vmem:[%s0 + $0x378] sm:$0xff]
  %v130 = vld [vmem:[%s0 + $0x380] sm:$0xff]
  %v131 = vld [vmem:[%s0 + $0x388] sm:$0xff]
  %v132 = vld [vmem:[%s0 + $0x390] sm:$0xff]
  %v133 = vld [vmem:[%s0 + $0x398] sm:$0xff]
  %v134 = vld [vmem:[%s0 + $0x3a0] sm:$0xff]
  %v135 = vld [vmem:[%s0 + $0x3a8] sm:$0xff]
  %v136 = vld [vmem:[%s0 + $0x3b0] sm:$0xff]
  %v137 = vld [vmem:[%s0 + $0x3b8] sm:$0xff]
  %v138 = vld [vmem:[%s0 + $0x3c0] sm:$0xff]
  %v139 = vld [vmem:[%s0 + $0x3c8] sm:$0xff]
  %v140 = vld [vmem:[%s0 + $0x3d0] sm:$0xff]
  %v141 = vld [vmem:[%s0 + $0x3d8] sm:$0xff]
  %v142 = vld [vmem:[%s0 + $0x3e0] sm:$0xff]
  %v143 = vld [vmem:[%s0 + $0x3e8] sm:$0xff]
  %v144 = vld [vmem:[%s0 + $0x3f0] sm:$0xff]
  %v145 = vld [vmem:[%s0 + $0x3f8] sm:$0xff]
  %v146 = vld [vmem:[%s0 + $0x400] sm:$0xff]
  %v147 = vld [vmem:[%s0 + $0x408] sm:$0xff]
  %v148 = vld [vmem:[%s0 + $0x410] sm:$0xff]
  %v149 = vld [vmem:[%s0 + $0x418] sm:$0xff]
  %v150 = vld [vmem:[%s0 + $0x420] sm:$0xff]
  %v151 = vld [vmem:[%s0 + $0x428] sm:$0xff]
  %v152 = vld [vmem:[%s0 + $0x430] sm:$0xff]
  %v153 = vld [vmem:[%s0 + $0x438] sm:$0xff]
  %v154 = vld [vmem:[%s0 + $0x440] sm:$0xff]
  %v155 = vld [vmem:[%s0 + $0x448] sm:$0xff]
  %v156 = vld [vmem:[%s0 + $0x450] sm:$0xff]
  %v157 = vld [vmem:[%s0 + $0x458] sm:$0xff]
  %v158 = vld [vmem:[%s0 + $0x460] sm:$0xff]
  %v159 = vld [vmem:[%s0 + $0x468] sm:$0xff]
  %v160 = vld [vmem:[%s0 + $0x470] sm:$0xff]
  %v161 = vld [vmem:[%s0 + $0x478] sm:$0xff]
  %v162 = vld [vmem:[%s0 + $0x480] sm:$0xff]
  %v163 = vld [vmem:[%s0 + $0x488] sm:$0xff]
  %v164 = vld [vmem:[%s0 + $0x490] sm:$0xff]
  %v165 = vld [vmem:[%s0 + $0x498] sm:$0xff]
  %v166 = vld [vmem:[%s0 + $0x4a0] sm:$0xff]
  %v167 = vld [vmem:[%s0 + $0x4a8] sm:$0xff]
  %v168 = vld [vmem:[%s0 + $0x4b0] sm:$0xff]
  %v169 = vld [vmem:[%s0 + $0x4b8] sm:$0xff]
  %v170 = vld [vmem:[%s0 + $0x4c0] sm:$0xff]
  %v171 = vld [vmem:[%s0 + $0x4c8] sm:$0xff]
  %v172 = vld [vmem:[%s0 + $0x4d0] sm:$0xff]
  %v173 = vld [vmem:[%s0 + $0x4d8] sm:$0xff]
  %v174 = vld [vmem:[%s0 + $0x4e0] sm:$0xff]
  %v175 = vld [vmem:[%s0 + $0x4e8] sm:$0xff]
  %v176 = vld [vmem:[%s0 + $0x4f0] sm:$0xff]
  %v177 = vld [vmem:[%s0 + $0x4f8] sm:$0xff]
  %v178 = vld [vmem:[%s0 + $0x500] sm:$0xff]
  %v179 = vld [vmem:[%s0 + $0x508] sm:$0xff]
  %v180 = vld [vmem:[%s0 + $0x510] sm:$0xff]
  %v181 = vld [vmem:[%s0 + $0x518] sm:$0xff]
  %v182 = vld [vmem:[%s0 + $0x520] sm:$0xff]
  %v183 = vld [vmem:[%s0 + $0x528] sm:$0xff]
  %v184 = vld [vmem:[%s0 + $0x530] sm:$0xff]
  %v185 = vld [vmem:[%s0 + $0x538] sm:$0xff]
  %v186 = vld [vmem:[%s0 + $0x540] sm:$0xff]
  %v187 = vld [vmem:[%s0 + $0x548] sm:$0xff]
  %v188 = vld [vmem:[%s0 + $0x550] sm:$0xff]
  %v189 = vld [vmem:[%s0 + $0x558] sm:$0xff]
  %v190 = vld [vmem:[%s0 + $0x560] sm:$0xff]
  %v191 = vld [vmem:[%s0 + $0x568] sm:$0xff]
  %v192 = vld [vmem:[%s0 + $0x570] sm:$0xff]
  %v193 = vld [vmem:[%s0 + $0x578] sm:$0xff]
  %v194 = vld [vmem:[%s0 + $0x580] sm:$0xff]
  %v195 = vld [vmem:[%s0 + $0x588] sm:$0xff]
  %v196 = vld [vmem:[%s0 + $0x590] sm:$0xff]
  %v197 = vld [vmem:[%s0 + $0x598] sm:$0xff]
  %v198 = vld [vmem:[%s0 + $0x5a0] sm:$0xff]
  %v199 = vld [vmem:[%s0 + $0x5a8] sm:$0xff]
  %v200 = vld [vmem:[%s0 + $0x5b0] sm:$0xff]
  %v201 = vld [vmem:[%s0 + $0x5b8] sm:$0xff]
  %v202 = vld [vmem:[%s0 + $0x5c0] sm:$0xff]
  %v203 = vld [vmem:[%s0 + $0x5c8] sm:$0xff]
  %v204 = vld [vmem:[%s0 + $0x5d0] sm:$0xff]
  %v205 = vld [vmem:[%s0 + $0x5d8] sm:$0xff]
  %v206 = vld [vmem:[%s0 + $0x5e0] sm:$0xff]
  %v207 = vld [vmem:[%s0 + $0x5e8] sm:$0xff]
  %v208 = vld [vmem:[%s0 + $0x5f0] sm:$0xff]
  %v209 = vld [vmem:[%s0 + $0x5f8] sm:$0xff]
  %v210 = vld [vmem:[%s0 + $0x600] sm:$0xff]
  %v211 = vld [vmem:[%s0 + $0x608] sm:$0xff]
  %v212 = vld [vmem:[%s0 + $0x610] sm:$0xff]
  %v213 = vld [vmem:[%s0 + $0x618] sm:$0xff]
  %v214 = vpack.c.bf16 %v19, %v18
  %v215 = vpack.c.bf16 %v21, %v20
  %v216 = vpack.c.bf16 %v23, %v22
  %v217 = vpack.c.bf16 %v25, %v24
  %v218 = vpack.c.bf16 %v27, %v26
  %v219 = vpack.c.bf16 %v29, %v28
  %v220 = vpack.c.bf16 %v31, %v30
  %v221 = vpack.c.bf16 %v33, %v32
  %v222 = vpack.c.bf16 %v35, %v34
  %v223 = vpack.c.bf16 %v37, %v36
  %v224 = vpack.c.bf16 %v39, %v38
  %v225 = vpack.c.bf16 %v41, %v40
  %v226 = vpack.c.bf16 %v43, %v42
  %v227 = vpack.c.bf16 %v45, %v44
  %v228 = vpack.c.bf16 %v47, %v46
  %v229 = vpack.c.bf16 %v49, %v48
  %v230 = vpack.c.bf16 %v51, %v50
  %v231 = vpack.c.bf16 %v53, %v52
  %v232 = vpack.c.bf16 %v55, %v54
  %v233 = vpack.c.bf16 %v57, %v56
  %v234 = vpack.c.bf16 %v59, %v58
  %v235 = vpack.c.bf16 %v61, %v60
  %v236 = vpack.c.bf16 %v63, %v62
  %v237 = vpack.c.bf16 %v65, %v64
  %v238 = vpack.c.bf16 %v67, %v66
  %v239 = vpack.c.bf16 %v69, %v68
  %v240 = vpack.c.bf16 %v71, %v70
  %v241 = vpack.c.bf16 %v73, %v72
  %v242 = vpack.c.bf16 %v75, %v74
  %v243 = vpack.c.bf16 %v77, %v76
  %v244 = vpack.c.bf16 %v79, %v78
  %v245 = vpack.c.bf16 %v81, %v80
  %v246 = vpack.c.bf16 %v83, %v82
  %v247 = vpack.c.bf16 %v85, %v84
  %v248 = vpack.c.bf16 %v87, %v86
  %v249 = vpack.c.bf16 %v89, %v88
  %v250 = vpack.c.bf16 %v91, %v90
  %v251 = vpack.c.bf16 %v93, %v92
  %v252 = vpack.c.bf16 %v95, %v94
  %v253 = vpack.c.bf16 %v97, %v96
  %v254 = vpack.c.bf16 %v99, %v98
  %v255 = vpack.c.bf16 %v101, %v100
  %v256 = vpack.c.bf16 %v103, %v102
  %v257 = vpack.c.bf16 %v105, %v104
  %v258 = vpack.c.bf16 %v107, %v106
  %v259 = vpack.c.bf16 %v109, %v108
  %v260 = vpack.c.bf16 %v111, %v110
  %v261 = vpack.c.bf16 %v113, %v112
  %v262 = vpack.c.bf16 %v115, %v114
  %v263 = vpack.c.bf16 %v117, %v116
  %v264 = vpack.c.bf16 %v119, %v118
  %v265 = vpack.c.bf16 %v121, %v120
  %v266 = vpack.c.bf16 %v123, %v122
  %v267 = vpack.c.bf16 %v125, %v124
  %v268 = vpack.c.bf16 %v127, %v126
  %v269 = vpack.c.bf16 %v129, %v128
  %v270 = vpack.c.bf16 %v131, %v130
  %v271 = vpack.c.bf16 %v133, %v132
  %v272 = vpack.c.bf16 %v135, %v134
  %v273 = vpack.c.bf16 %v137, %v136
  %v274 = vpack.c.bf16 %v139, %v138
  %v275 = vpack.c.bf16 %v141, %v140
  %v276 = vpack.c.bf16 %v143, %v142
  %v277 = vpack.c.bf16 %v145, %v144
  %v278 = vpack.c.bf16 %v147, %v146
  %v279 = vpack.c.bf16 %v149, %v148
  %v280 = vpack.c.bf16 %v151, %v150
  %v281 = vpack.c.bf16 %v153, %v152
  %v282 = vpack.c.bf16 %v155, %v154
  %v283 = vpack.c.bf16 %v157, %v156
  %v284 = vpack.c.bf16 %v159, %v158
  %v285 = vpack.c.bf16 %v161, %v160
  %v286 = vpack.c.bf16 %v163, %v162
  %v287 = vpack.c.bf16 %v165, %v164
  %v288 = vpack.c.bf16 %v167, %v166
  %v289 = vpack.c.bf16 %v169, %v168
  %v290 = vpack.c.bf16 %v171, %v170
  %v291 = vpack.c.bf16 %v173, %v172
  %v292 = vpack.c.bf16 %v175, %v174
  %v293 = vpack.c.bf16 %v177, %v176
  %v294 = vpack.c.bf16 %v179, %v178
  %v295 = vpack.c.bf16 %v181, %v180
  %v296 = vpack.c.bf16 %v183, %v182
  %v297 = vpack.c.bf16 %v185, %v184
  %v298 = vpack.c.bf16 %v187, %v186
  %v299 = vpack.c.bf16 %v189, %v188
  %v300 = vpack.c.bf16 %v191, %v190
  %v301 = vpack.c.bf16 %v193, %v192
  %v302 = vpack.c.bf16 %v195, %v194
  %v303 = vpack.c.bf16 %v197, %v196
  %v304 = vpack.c.bf16 %v199, %v198
  %v305 = vpack.c.bf16 %v201, %v200
  %v306 = vpack.c.bf16 %v203, %v202
  %v307 = vpack.c.bf16 %v205, %v204
  %v308 = vpack.c.bf16 %v207, %v206
  %v309 = vpack.c.bf16 %v209, %v208
  %v310 = vpack.c.bf16 %v211, %v210
  %v311 = vpack.c.bf16 %v213, %v212
  %v312 = vld [vmem:[%s1] sm:$0xff]
  %v313 = vld [vmem:[%s1 + $0x8] sm:$0x1]
  %v314 = vpack.c.bf16 %v313, %v312
  %vm315 = vcmask 72704
  %v317 = vsel %vm315, %v214, 0
  %v320 = vsel %vm315, %v215, 0
  %v323 = vsel %vm315, %v216, 0
  %v326 = vsel %vm315, %v217, 0
  %v329 = vsel %vm315, %v218, 0
  %v332 = vsel %vm315, %v219, 0
  %v335 = vsel %vm315, %v220, 0
  %v338 = vsel %vm315, %v221, 0
  %v341 = vsel %vm315, %v222, 0
  %v344 = vsel %vm315, %v223, 0
  %v347 = vsel %vm315, %v224, 0
  %v350 = vsel %vm315, %v225, 0
  %v353 = vsel %vm315, %v226, 0
  %v356 = vsel %vm315, %v227, 0
  %v359 = vsel %vm315, %v228, 0
  %v362 = vsel %vm315, %v229, 0
  %v365 = vsel %vm315, %v230, 0
  %v368 = vsel %vm315, %v231, 0
  %v371 = vsel %vm315, %v232, 0
  %v374 = vsel %vm315, %v233, 0
  %v377 = vsel %vm315, %v234, 0
  %v380 = vsel %vm315, %v235, 0
  %v383 = vsel %vm315, %v236, 0
  %v386 = vsel %vm315, %v237, 0
  %v389 = vsel %vm315, %v238, 0
  %v392 = vsel %vm315, %v239, 0
  %v395 = vsel %vm315, %v240, 0
  %v398 = vsel %vm315, %v241, 0
  %v401 = vsel %vm315, %v242, 0
  %v404 = vsel %vm315, %v243, 0
  %v407 = vsel %vm315, %v244, 0
  %v410 = vsel %vm315, %v245, 0
  %v413 = vsel %vm315, %v246, 0
  %v416 = vsel %vm315, %v247, 0
  %v419 = vsel %vm315, %v248, 0
  %v422 = vsel %vm315, %v249, 0
  %v425 = vsel %vm315, %v250, 0
  %v428 = vsel %vm315, %v251, 0
  %v431 = vsel %vm315, %v252, 0
  %v434 = vsel %vm315, %v253, 0
  %v437 = vsel %vm315, %v254, 0
  %v440 = vsel %vm315, %v255, 0
  %v443 = vsel %vm315, %v256, 0
  %v446 = vsel %vm315, %v257, 0
  %v449 = vsel %vm315, %v258, 0
  %v452 = vsel %vm315, %v259, 0
  %v455 = vsel %vm315, %v260, 0
  %v458 = vsel %vm315, %v261, 0
  %v461 = vsel %vm315, %v262, 0
  %v464 = vsel %vm315, %v263, 0
  %v467 = vsel %vm315, %v264, 0
  %v470 = vsel %vm315, %v265, 0
  %v473 = vsel %vm315, %v266, 0
  %v476 = vsel %vm315, %v267, 0
  %v479 = vsel %vm315, %v268, 0
  %v482 = vsel %vm315, %v269, 0
  %v485 = vsel %vm315, %v270, 0
  %v488 = vsel %vm315, %v271, 0
  %v491 = vsel %vm315, %v272, 0
  %v494 = vsel %vm315, %v273, 0
  %v497 = vsel %vm315, %v274, 0
  %v500 = vsel %vm315, %v275, 0
  %v503 = vsel %vm315, %v276, 0
  %v506 = vsel %vm315, %v277, 0
  %v509 = vsel %vm315, %v278, 0
  %v512 = vsel %vm315, %v279, 0
  %v515 = vsel %vm315, %v280, 0
  %v518 = vsel %vm315, %v281, 0
  %v521 = vsel %vm315, %v282, 0
  %v524 = vsel %vm315, %v283, 0
  %v527 = vsel %vm315, %v284, 0
  %v530 = vsel %vm315, %v285, 0
  %v533 = vsel %vm315, %v286, 0
  %v536 = vsel %vm315, %v287, 0
  %v539 = vsel %vm315, %v288, 0
  %v542 = vsel %vm315, %v289, 0
  %v545 = vsel %vm315, %v290, 0
  %v548 = vsel %vm315, %v291, 0
  %v551 = vsel %vm315, %v292, 0
  %v554 = vsel %vm315, %v293, 0
  %v557 = vsel %vm315, %v294, 0
  %v560 = vsel %vm315, %v295, 0
  %v563 = vsel %vm315, %v296, 0
  %v566 = vsel %vm315, %v297, 0
  %v569 = vsel %vm315, %v298, 0
  %v572 = vsel %vm315, %v299, 0
  %v575 = vsel %vm315, %v300, 0
  %v578 = vsel %vm315, %v301, 0
  %v581 = vsel %vm315, %v302, 0
  %v584 = vsel %vm315, %v303, 0
  %v587 = vsel %vm315, %v304, 0
  %v590 = vsel %vm315, %v305, 0
  %v593 = vsel %vm315, %v306, 0
  %v596 = vsel %vm315, %v307, 0
  %v599 = vsel %vm315, %v308, 0
  %v602 = vsel %vm315, %v309, 0
  %v605 = vsel %vm315, %v310, 0
  %v608 = vsel %vm315, %v311, 0
  %vm610 = vcmask 1043456
  %vm611 = vcmask 1044480
  %v612 = vsel %vm610, 4294967295, 65535
  %v613 = vsel %vm611, %v612, 0
  %v615 = vand.u32 %v314, %v613
  %617 = vmatpush.bf16.msra.mxu0 0
  %618 = vmatpush.bf16.msra.mxu0 0
  %619 = vmatpush.bf16.msra.mxu0 0
  %620 = vmatpush.bf16.msra.mxu0 0
  %621 = vmatpush.bf16.msra.mxu0 0
  %622 = vmatpush.bf16.msra.mxu0 0
  %623 = vmatpush.bf16.msra.mxu0 0
  %624 = vmatpush.bf16.msra.mxu0 %v615
  %625 = vmatmul.bf16.gmra.mxu0 %v317
  %v626 = vpop.f32.mrf.mxu0
  %v627 = vadd.f32 0.0, %v626
  %v628 = vpop.f32.mrf.mxu0
  %v629 = vadd.f32 0.0, %v628
  %630 = vmatmul.bf16.gmra.mxu0 %v320
  %v631 = vpop.f32.mrf.mxu0
  %v632 = vadd.f32 0.0, %v631
  %v633 = vpop.f32.mrf.mxu0
  %v634 = vadd.f32 0.0, %v633
  %635 = vmatmul.bf16.gmra.mxu0 %v323
  %v636 = vpop.f32.mrf.mxu0
  %v637 = vadd.f32 0.0, %v636
  %v638 = vpop.f32.mrf.mxu0
  %v639 = vadd.f32 0.0, %v638
  %640 = vmatmul.bf16.gmra.mxu0 %v326
  %v641 = vpop.f32.mrf.mxu0
  %v642 = vadd.f32 0.0, %v641
  %v643 = vpop.f32.mrf.mxu0
  %v644 = vadd.f32 0.0, %v643
  %645 = vmatmul.bf16.gmra.mxu0 %v329
  %v646 = vpop.f32.mrf.mxu0
  %v647 = vadd.f32 0.0, %v646
  %v648 = vpop.f32.mrf.mxu0
  %v649 = vadd.f32 0.0, %v648
  %650 = vmatmul.bf16.gmra.mxu0 %v332
  %v651 = vpop.f32.mrf.mxu0
  %v652 = vadd.f32 0.0, %v651
  %v653 = vpop.f32.mrf.mxu0
  %v654 = vadd.f32 0.0, %v653
  %655 = vmatmul.bf16.gmra.mxu0 %v335
  %v656 = vpop.f32.mrf.mxu0
  %v657 = vadd.f32 0.0, %v656
  %v658 = vpop.f32.mrf.mxu0
  %v659 = vadd.f32 0.0, %v658
  %660 = vmatmul.bf16.gmra.mxu0 %v338
  %v661 = vpop.f32.mrf.mxu0
  %v662 = vadd.f32 0.0, %v661
  %v663 = vpop.f32.mrf.mxu0
  %v664 = vadd.f32 0.0, %v663
  %665 = vmatmul.bf16.gmra.mxu0 %v341
  %v666 = vpop.f32.mrf.mxu0
  %v667 = vadd.f32 0.0, %v666
  %v668 = vpop.f32.mrf.mxu0
  %v669 = vadd.f32 0.0, %v668
  %670 = vmatmul.bf16.gmra.mxu0 %v344
  %v671 = vpop.f32.mrf.mxu0
  %v672 = vadd.f32 0.0, %v671
  %v673 = vpop.f32.mrf.mxu0
  %v674 = vadd.f32 0.0, %v673
  %675 = vmatmul.bf16.gmra.mxu0 %v347
  %v676 = vpop.f32.mrf.mxu0
  %v677 = vadd.f32 0.0, %v676
  %v678 = vpop.f32.mrf.mxu0
  %v679 = vadd.f32 0.0, %v678
  %680 = vmatmul.bf16.gmra.mxu0 %v350
  %v681 = vpop.f32.mrf.mxu0
  %v682 = vadd.f32 0.0, %v681
  %v683 = vpop.f32.mrf.mxu0
  %v684 = vadd.f32 0.0, %v683
  %685 = vmatmul.bf16.gmra.mxu0 %v353
  %v686 = vpop.f32.mrf.mxu0
  %v687 = vadd.f32 0.0, %v686
  %v688 = vpop.f32.mrf.mxu0
  %v689 = vadd.f32 0.0, %v688
  %690 = vmatmul.bf16.gmra.mxu0 %v356
  %v691 = vpop.f32.mrf.mxu0
  %v692 = vadd.f32 0.0, %v691
  %v693 = vpop.f32.mrf.mxu0
  %v694 = vadd.f32 0.0, %v693
  %695 = vmatmul.bf16.gmra.mxu0 %v359
  %v696 = vpop.f32.mrf.mxu0
  %v697 = vadd.f32 0.0, %v696
  %v698 = vpop.f32.mrf.mxu0
  %v699 = vadd.f32 0.0, %v698
  %700 = vmatmul.bf16.gmra.mxu0 %v362
  %v701 = vpop.f32.mrf.mxu0
  %v702 = vadd.f32 0.0, %v701
  %v703 = vpop.f32.mrf.mxu0
  %v704 = vadd.f32 0.0, %v703
  %705 = vmatmul.bf16.gmra.mxu0 %v365
  %v706 = vpop.f32.mrf.mxu0
  %v707 = vadd.f32 0.0, %v706
  %v708 = vpop.f32.mrf.mxu0
  %v709 = vadd.f32 0.0, %v708
  %710 = vmatmul.bf16.gmra.mxu0 %v368
  %v711 = vpop.f32.mrf.mxu0
  %v712 = vadd.f32 0.0, %v711
  %v713 = vpop.f32.mrf.mxu0
  %v714 = vadd.f32 0.0, %v713
  %715 = vmatmul.bf16.gmra.mxu0 %v371
  %v716 = vpop.f32.mrf.mxu0
  %v717 = vadd.f32 0.0, %v716
  %v718 = vpop.f32.mrf.mxu0
  %v719 = vadd.f32 0.0, %v718
  %720 = vmatmul.bf16.gmra.mxu0 %v374
  %v721 = vpop.f32.mrf.mxu0
  %v722 = vadd.f32 0.0, %v721
  %v723 = vpop.f32.mrf.mxu0
  %v724 = vadd.f32 0.0, %v723
  %725 = vmatmul.bf16.gmra.mxu0 %v377
  %v726 = vpop.f32.mrf.mxu0
  %v727 = vadd.f32 0.0, %v726
  %v728 = vpop.f32.mrf.mxu0
  %v729 = vadd.f32 0.0, %v728
  %730 = vmatmul.bf16.gmra.mxu0 %v380
  %v731 = vpop.f32.mrf.mxu0
  %v732 = vadd.f32 0.0, %v731
  %v733 = vpop.f32.mrf.mxu0
  %v734 = vadd.f32 0.0, %v733
  %735 = vmatmul.bf16.gmra.mxu0 %v383
  %v736 = vpop.f32.mrf.mxu0
  %v737 = vadd.f32 0.0, %v736
  %v738 = vpop.f32.mrf.mxu0
  %v739 = vadd.f32 0.0, %v738
  %740 = vmatmul.bf16.gmra.mxu0 %v386
  %v741 = vpop.f32.mrf.mxu0
  %v742 = vadd.f32 0.0, %v741
  %v743 = vpop.f32.mrf.mxu0
  %v744 = vadd.f32 0.0, %v743
  %745 = vmatmul.bf16.gmra.mxu0 %v389
  %v746 = vpop.f32.mrf.mxu0
  %v747 = vadd.f32 0.0, %v746
  %v748 = vpop.f32.mrf.mxu0
  %v749 = vadd.f32 0.0, %v748
  %750 = vmatmul.bf16.gmra.mxu0 %v392
  %v751 = vpop.f32.mrf.mxu0
  %v752 = vadd.f32 0.0, %v751
  %v753 = vpop.f32.mrf.mxu0
  %v754 = vadd.f32 0.0, %v753
  %755 = vmatmul.bf16.gmra.mxu0 %v395
  %v756 = vpop.f32.mrf.mxu0
  %v757 = vadd.f32 0.0, %v756
  %v758 = vpop.f32.mrf.mxu0
  %v759 = vadd.f32 0.0, %v758
  %760 = vmatmul.bf16.gmra.mxu0 %v398
  %v761 = vpop.f32.mrf.mxu0
  %v762 = vadd.f32 0.0, %v761
  %v763 = vpop.f32.mrf.mxu0
  %v764 = vadd.f32 0.0, %v763
  %765 = vmatmul.bf16.gmra.mxu0 %v401
  %v766 = vpop.f32.mrf.mxu0
  %v767 = vadd.f32 0.0, %v766
  %v768 = vpop.f32.mrf.mxu0
  %v769 = vadd.f32 0.0, %v768
  %770 = vmatmul.bf16.gmra.mxu0 %v404
  %v771 = vpop.f32.mrf.mxu0
  %v772 = vadd.f32 0.0, %v771
  %v773 = vpop.f32.mrf.mxu0
  %v774 = vadd.f32 0.0, %v773
  %775 = vmatmul.bf16.gmra.mxu0 %v407
  %v776 = vpop.f32.mrf.mxu0
  %v777 = vadd.f32 0.0, %v776
  %v778 = vpop.f32.mrf.mxu0
  %v779 = vadd.f32 0.0, %v778
  %780 = vmatmul.bf16.gmra.mxu0 %v410
  %v781 = vpop.f32.mrf.mxu0
  %v782 = vadd.f32 0.0, %v781
  %v783 = vpop.f32.mrf.mxu0
  %v784 = vadd.f32 0.0, %v783
  %785 = vmatmul.bf16.gmra.mxu0 %v413
  %v786 = vpop.f32.mrf.mxu0
  %v787 = vadd.f32 0.0, %v786
  %v788 = vpop.f32.mrf.mxu0
  %v789 = vadd.f32 0.0, %v788
  %790 = vmatmul.bf16.gmra.mxu0 %v416
  %v791 = vpop.f32.mrf.mxu0
  %v792 = vadd.f32 0.0, %v791
  %v793 = vpop.f32.mrf.mxu0
  %v794 = vadd.f32 0.0, %v793
  %795 = vmatmul.bf16.gmra.mxu0 %v419
  %v796 = vpop.f32.mrf.mxu0
  %v797 = vadd.f32 0.0, %v796
  %v798 = vpop.f32.mrf.mxu0
  %v799 = vadd.f32 0.0, %v798
  %800 = vmatmul.bf16.gmra.mxu0 %v422
  %v801 = vpop.f32.mrf.mxu0
  %v802 = vadd.f32 0.0, %v801
  %v803 = vpop.f32.mrf.mxu0
  %v804 = vadd.f32 0.0, %v803
  %805 = vmatmul.bf16.gmra.mxu0 %v425
  %v806 = vpop.f32.mrf.mxu0
  %v807 = vadd.f32 0.0, %v806
  %v808 = vpop.f32.mrf.mxu0
  %v809 = vadd.f32 0.0, %v808
  %810 = vmatmul.bf16.gmra.mxu0 %v428
  %v811 = vpop.f32.mrf.mxu0
  %v812 = vadd.f32 0.0, %v811
  %v813 = vpop.f32.mrf.mxu0
  %v814 = vadd.f32 0.0, %v813
  %815 = vmatmul.bf16.gmra.mxu0 %v431
  %v816 = vpop.f32.mrf.mxu0
  %v817 = vadd.f32 0.0, %v816
  %v818 = vpop.f32.mrf.mxu0
  %v819 = vadd.f32 0.0, %v818
  %820 = vmatmul.bf16.gmra.mxu0 %v434
  %v821 = vpop.f32.mrf.mxu0
  %v822 = vadd.f32 0.0, %v821
  %v823 = vpop.f32.mrf.mxu0
  %v824 = vadd.f32 0.0, %v823
  %825 = vmatmul.bf16.gmra.mxu0 %v437
  %v826 = vpop.f32.mrf.mxu0
  %v827 = vadd.f32 0.0, %v826
  %v828 = vpop.f32.mrf.mxu0
  %v829 = vadd.f32 0.0, %v828
  %830 = vmatmul.bf16.gmra.mxu0 %v440
  %v831 = vpop.f32.mrf.mxu0
  %v832 = vadd.f32 0.0, %v831
  %v833 = vpop.f32.mrf.mxu0
  %v834 = vadd.f32 0.0, %v833
  %835 = vmatmul.bf16.gmra.mxu0 %v443
  %v836 = vpop.f32.mrf.mxu0
  %v837 = vadd.f32 0.0, %v836
  %v838 = vpop.f32.mrf.mxu0
  %v839 = vadd.f32 0.0, %v838
  %840 = vmatmul.bf16.gmra.mxu0 %v446
  %v841 = vpop.f32.mrf.mxu0
  %v842 = vadd.f32 0.0, %v841
  %v843 = vpop.f32.mrf.mxu0
  %v844 = vadd.f32 0.0, %v843
  %845 = vmatmul.bf16.gmra.mxu0 %v449
  %v846 = vpop.f32.mrf.mxu0
  %v847 = vadd.f32 0.0, %v846
  %v848 = vpop.f32.mrf.mxu0
  %v849 = vadd.f32 0.0, %v848
  %850 = vmatmul.bf16.gmra.mxu0 %v452
  %v851 = vpop.f32.mrf.mxu0
  %v852 = vadd.f32 0.0, %v851
  %v853 = vpop.f32.mrf.mxu0
  %v854 = vadd.f32 0.0, %v853
  %855 = vmatmul.bf16.gmra.mxu0 %v455
  %v856 = vpop.f32.mrf.mxu0
  %v857 = vadd.f32 0.0, %v856
  %v858 = vpop.f32.mrf.mxu0
  %v859 = vadd.f32 0.0, %v858
  %860 = vmatmul.bf16.gmra.mxu0 %v458
  %v861 = vpop.f32.mrf.mxu0
  %v862 = vadd.f32 0.0, %v861
  %v863 = vpop.f32.mrf.mxu0
  %v864 = vadd.f32 0.0, %v863
  %865 = vmatmul.bf16.gmra.mxu0 %v461
  %v866 = vpop.f32.mrf.mxu0
  %v867 = vadd.f32 0.0, %v866
  %v868 = vpop.f32.mrf.mxu0
  %v869 = vadd.f32 0.0, %v868
  %870 = vmatmul.bf16.gmra.mxu0 %v464
  %v871 = vpop.f32.mrf.mxu0
  %v872 = vadd.f32 0.0, %v871
  %v873 = vpop.f32.mrf.mxu0
  %v874 = vadd.f32 0.0, %v873
  %875 = vmatmul.bf16.gmra.mxu0 %v467
  %v876 = vpop.f32.mrf.mxu0
  %v877 = vadd.f32 0.0, %v876
  %v878 = vpop.f32.mrf.mxu0
  %v879 = vadd.f32 0.0, %v878
  %880 = vmatmul.bf16.gmra.mxu0 %v470
  %v881 = vpop.f32.mrf.mxu0
  %v882 = vadd.f32 0.0, %v881
  %v883 = vpop.f32.mrf.mxu0
  %v884 = vadd.f32 0.0, %v883
  %885 = vmatmul.bf16.gmra.mxu0 %v473
  %v886 = vpop.f32.mrf.mxu0
  %v887 = vadd.f32 0.0, %v886
  %v888 = vpop.f32.mrf.mxu0
  %v889 = vadd.f32 0.0, %v888
  %890 = vmatmul.bf16.gmra.mxu0 %v476
  %v891 = vpop.f32.mrf.mxu0
  %v892 = vadd.f32 0.0, %v891
  %v893 = vpop.f32.mrf.mxu0
  %v894 = vadd.f32 0.0, %v893
  %895 = vmatmul.bf16.gmra.mxu0 %v479
  %v896 = vpop.f32.mrf.mxu0
  %v897 = vadd.f32 0.0, %v896
  %v898 = vpop.f32.mrf.mxu0
  %v899 = vadd.f32 0.0, %v898
  %900 = vmatmul.bf16.gmra.mxu0 %v482
  %v901 = vpop.f32.mrf.mxu0
  %v902 = vadd.f32 0.0, %v901
  %v903 = vpop.f32.mrf.mxu0
  %v904 = vadd.f32 0.0, %v903
  %905 = vmatmul.bf16.gmra.mxu0 %v485
  %v906 = vpop.f32.mrf.mxu0
  %v907 = vadd.f32 0.0, %v906
  %v908 = vpop.f32.mrf.mxu0
  %v909 = vadd.f32 0.0, %v908
  %910 = vmatmul.bf16.gmra.mxu0 %v488
  %v911 = vpop.f32.mrf.mxu0
  %v912 = vadd.f32 0.0, %v911
  %v913 = vpop.f32.mrf.mxu0
  %v914 = vadd.f32 0.0, %v913
  %915 = vmatmul.bf16.gmra.mxu0 %v491
  %v916 = vpop.f32.mrf.mxu0
  %v917 = vadd.f32 0.0, %v916
  %v918 = vpop.f32.mrf.mxu0
  %v919 = vadd.f32 0.0, %v918
  %920 = vmatmul.bf16.gmra.mxu0 %v494
  %v921 = vpop.f32.mrf.mxu0
  %v922 = vadd.f32 0.0, %v921
  %v923 = vpop.f32.mrf.mxu0
  %v924 = vadd.f32 0.0, %v923
  %925 = vmatmul.bf16.gmra.mxu0 %v497
  %v926 = vpop.f32.mrf.mxu0
  %v927 = vadd.f32 0.0, %v926
  %v928 = vpop.f32.mrf.mxu0
  %v929 = vadd.f32 0.0, %v928
  %930 = vmatmul.bf16.gmra.mxu0 %v500
  %v931 = vpop.f32.mrf.mxu0
  %v932 = vadd.f32 0.0, %v931
  %v933 = vpop.f32.mrf.mxu0
  %v934 = vadd.f32 0.0, %v933
  %935 = vmatmul.bf16.gmra.mxu0 %v503
  %v936 = vpop.f32.mrf.mxu0
  %v937 = vadd.f32 0.0, %v936
  %v938 = vpop.f32.mrf.mxu0
  %v939 = vadd.f32 0.0, %v938
  %940 = vmatmul.bf16.gmra.mxu0 %v506
  %v941 = vpop.f32.mrf.mxu0
  %v942 = vadd.f32 0.0, %v941
  %v943 = vpop.f32.mrf.mxu0
  %v944 = vadd.f32 0.0, %v943
  %945 = vmatmul.bf16.gmra.mxu0 %v509
  %v946 = vpop.f32.mrf.mxu0
  %v947 = vadd.f32 0.0, %v946
  %v948 = vpop.f32.mrf.mxu0
  %v949 = vadd.f32 0.0, %v948
  %950 = vmatmul.bf16.gmra.mxu0 %v512
  %v951 = vpop.f32.mrf.mxu0
  %v952 = vadd.f32 0.0, %v951
  %v953 = vpop.f32.mrf.mxu0
  %v954 = vadd.f32 0.0, %v953
  %955 = vmatmul.bf16.gmra.mxu0 %v515
  %v956 = vpop.f32.mrf.mxu0
  %v957 = vadd.f32 0.0, %v956
  %v958 = vpop.f32.mrf.mxu0
  %v959 = vadd.f32 0.0, %v958
  %960 = vmatmul.bf16.gmra.mxu0 %v518
  %v961 = vpop.f32.mrf.mxu0
  %v962 = vadd.f32 0.0, %v961
  %v963 = vpop.f32.mrf.mxu0
  %v964 = vadd.f32 0.0, %v963
  %965 = vmatmul.bf16.gmra.mxu0 %v521
  %v966 = vpop.f32.mrf.mxu0
  %v967 = vadd.f32 0.0, %v966
  %v968 = vpop.f32.mrf.mxu0
  %v969 = vadd.f32 0.0, %v968
  %970 = vmatmul.bf16.gmra.mxu0 %v524
  %v971 = vpop.f32.mrf.mxu0
  %v972 = vadd.f32 0.0, %v971
  %v973 = vpop.f32.mrf.mxu0
  %v974 = vadd.f32 0.0, %v973
  %975 = vmatmul.bf16.gmra.mxu0 %v527
  %v976 = vpop.f32.mrf.mxu0
  %v977 = vadd.f32 0.0, %v976
  %v978 = vpop.f32.mrf.mxu0
  %v979 = vadd.f32 0.0, %v978
  %980 = vmatmul.bf16.gmra.mxu0 %v530
  %v981 = vpop.f32.mrf.mxu0
  %v982 = vadd.f32 0.0, %v981
  %v983 = vpop.f32.mrf.mxu0
  %v984 = vadd.f32 0.0, %v983
  %985 = vmatmul.bf16.gmra.mxu0 %v533
  %v986 = vpop.f32.mrf.mxu0
  %v987 = vadd.f32 0.0, %v986
  %v988 = vpop.f32.mrf.mxu0
  %v989 = vadd.f32 0.0, %v988
  %990 = vmatmul.bf16.gmra.mxu0 %v536
  %v991 = vpop.f32.mrf.mxu0
  %v992 = vadd.f32 0.0, %v991
  %v993 = vpop.f32.mrf.mxu0
  %v994 = vadd.f32 0.0, %v993
  %995 = vmatmul.bf16.gmra.mxu0 %v539
  %v996 = vpop.f32.mrf.mxu0
  %v997 = vadd.f32 0.0, %v996
  %v998 = vpop.f32.mrf.mxu0
  %v999 = vadd.f32 0.0, %v998
  %1000 = vmatmul.bf16.gmra.mxu0 %v542
  %v1001 = vpop.f32.mrf.mxu0
  %v1002 = vadd.f32 0.0, %v1001
  %v1003 = vpop.f32.mrf.mxu0
  %v1004 = vadd.f32 0.0, %v1003
  %1005 = vmatmul.bf16.gmra.mxu0 %v545
  %v1006 = vpop.f32.mrf.mxu0
  %v1007 = vadd.f32 0.0, %v1006
  %v1008 = vpop.f32.mrf.mxu0
  %v1009 = vadd.f32 0.0, %v1008
  %1010 = vmatmul.bf16.gmra.mxu0 %v548
  %v1011 = vpop.f32.mrf.mxu0
  %v1012 = vadd.f32 0.0, %v1011
  %v1013 = vpop.f32.mrf.mxu0
  %v1014 = vadd.f32 0.0, %v1013
  %1015 = vmatmul.bf16.gmra.mxu0 %v551
  %v1016 = vpop.f32.mrf.mxu0
  %v1017 = vadd.f32 0.0, %v1016
  %v1018 = vpop.f32.mrf.mxu0
  %v1019 = vadd.f32 0.0, %v1018
  %1020 = vmatmul.bf16.gmra.mxu0 %v554
  %v1021 = vpop.f32.mrf.mxu0
  %v1022 = vadd.f32 0.0, %v1021
  %v1023 = vpop.f32.mrf.mxu0
  %v1024 = vadd.f32 0.0, %v1023
  %1025 = vmatmul.bf16.gmra.mxu0 %v557
  %v1026 = vpop.f32.mrf.mxu0
  %v1027 = vadd.f32 0.0, %v1026
  %v1028 = vpop.f32.mrf.mxu0
  %v1029 = vadd.f32 0.0, %v1028
  %1030 = vmatmul.bf16.gmra.mxu0 %v560
  %v1031 = vpop.f32.mrf.mxu0
  %v1032 = vadd.f32 0.0, %v1031
  %v1033 = vpop.f32.mrf.mxu0
  %v1034 = vadd.f32 0.0, %v1033
  %1035 = vmatmul.bf16.gmra.mxu0 %v563
  %v1036 = vpop.f32.mrf.mxu0
  %v1037 = vadd.f32 0.0, %v1036
  %v1038 = vpop.f32.mrf.mxu0
  %v1039 = vadd.f32 0.0, %v1038
  %1040 = vmatmul.bf16.gmra.mxu0 %v566
  %v1041 = vpop.f32.mrf.mxu0
  %v1042 = vadd.f32 0.0, %v1041
  %v1043 = vpop.f32.mrf.mxu0
  %v1044 = vadd.f32 0.0, %v1043
  %1045 = vmatmul.bf16.gmra.mxu0 %v569
  %v1046 = vpop.f32.mrf.mxu0
  %v1047 = vadd.f32 0.0, %v1046
  %v1048 = vpop.f32.mrf.mxu0
  %v1049 = vadd.f32 0.0, %v1048
  %1050 = vmatmul.bf16.gmra.mxu0 %v572
  %v1051 = vpop.f32.mrf.mxu0
  %v1052 = vadd.f32 0.0, %v1051
  %v1053 = vpop.f32.mrf.mxu0
  %v1054 = vadd.f32 0.0, %v1053
  %1055 = vmatmul.bf16.gmra.mxu0 %v575
  %v1056 = vpop.f32.mrf.mxu0
  %v1057 = vadd.f32 0.0, %v1056
  %v1058 = vpop.f32.mrf.mxu0
  %v1059 = vadd.f32 0.0, %v1058
  %1060 = vmatmul.bf16.gmra.mxu0 %v578
  %v1061 = vpop.f32.mrf.mxu0
  %v1062 = vadd.f32 0.0, %v1061
  %v1063 = vpop.f32.mrf.mxu0
  %v1064 = vadd.f32 0.0, %v1063
  %1065 = vmatmul.bf16.gmra.mxu0 %v581
  %v1066 = vpop.f32.mrf.mxu0
  %v1067 = vadd.f32 0.0, %v1066
  %v1068 = vpop.f32.mrf.mxu0
  %v1069 = vadd.f32 0.0, %v1068
  %1070 = vmatmul.bf16.gmra.mxu0 %v584
  %v1071 = vpop.f32.mrf.mxu0
  %v1072 = vadd.f32 0.0, %v1071
  %v1073 = vpop.f32.mrf.mxu0
  %v1074 = vadd.f32 0.0, %v1073
  %1075 = vmatmul.bf16.gmra.mxu0 %v587
  %v1076 = vpop.f32.mrf.mxu0
  %v1077 = vadd.f32 0.0, %v1076
  %v1078 = vpop.f32.mrf.mxu0
  %v1079 = vadd.f32 0.0, %v1078
  %1080 = vmatmul.bf16.gmra.mxu0 %v590
  %v1081 = vpop.f32.mrf.mxu0
  %v1082 = vadd.f32 0.0, %v1081
  %v1083 = vpop.f32.mrf.mxu0
  %v1084 = vadd.f32 0.0, %v1083
  %1085 = vmatmul.bf16.gmra.mxu0 %v593
  %v1086 = vpop.f32.mrf.mxu0
  %v1087 = vadd.f32 0.0, %v1086
  %v1088 = vpop.f32.mrf.mxu0
  %v1089 = vadd.f32 0.0, %v1088
  %1090 = vmatmul.bf16.gmra.mxu0 %v596
  %v1091 = vpop.f32.mrf.mxu0
  %v1092 = vadd.f32 0.0, %v1091
  %v1093 = vpop.f32.mrf.mxu0
  %v1094 = vadd.f32 0.0, %v1093
  %1095 = vmatmul.bf16.gmra.mxu0 %v599
  %v1096 = vpop.f32.mrf.mxu0
  %v1097 = vadd.f32 0.0, %v1096
  %v1098 = vpop.f32.mrf.mxu0
  %v1099 = vadd.f32 0.0, %v1098
  %1100 = vmatmul.bf16.gmra.mxu0 %v602
  %v1101 = vpop.f32.mrf.mxu0
  %v1102 = vadd.f32 0.0, %v1101
  %v1103 = vpop.f32.mrf.mxu0
  %v1104 = vadd.f32 0.0, %v1103
  %1105 = vmatmul.bf16.gmra.mxu0 %v605
  %v1106 = vpop.f32.mrf.mxu0
  %v1107 = vadd.f32 0.0, %v1106
  %v1108 = vpop.f32.mrf.mxu0
  %v1109 = vadd.f32 0.0, %v1108
  %1110 = vmatmul.bf16.gmra.mxu0 %v608
  %v1111 = vpop.f32.mrf.mxu0
  %v1112 = vadd.f32 0.0, %v1111
  %v1113 = vpop.f32.mrf.mxu0
  %v1114 = vadd.f32 0.0, %v1113
  %1115 = vdwg.mxu0
  %v1116 = vld [vmem:[%s2] sm:$0x1]
  %v1118 = vperm.slane %v1116, 0
  %v1120 = vmul.f32 %v627, %v1118
  %v1121 = vmul.f32 %v629, %v1118
  %v1122 = vmul.f32 %v632, %v1118
  %v1123 = vmul.f32 %v634, %v1118
  %v1124 = vmul.f32 %v637, %v1118
  %v1125 = vmul.f32 %v639, %v1118
  %v1126 = vmul.f32 %v642, %v1118
  %v1127 = vmul.f32 %v644, %v1118
  %v1128 = vmul.f32 %v647, %v1118
  %v1129 = vmul.f32 %v649, %v1118
  %v1130 = vmul.f32 %v652, %v1118
  %v1131 = vmul.f32 %v654, %v1118
  %v1132 = vmul.f32 %v657, %v1118
  %v1133 = vmul.f32 %v659, %v1118
  %v1134 = vmul.f32 %v662, %v1118
  %v1135 = vmul.f32 %v664, %v1118
  %v1136 = vmul.f32 %v667, %v1118
  %v1137 = vmul.f32 %v669, %v1118
  %v1138 = vmul.f32 %v672, %v1118
  %v1139 = vmul.f32 %v674, %v1118
  %v1140 = vmul.f32 %v677, %v1118
  %v1141 = vmul.f32 %v679, %v1118
  %v1142 = vmul.f32 %v682, %v1118
  %v1143 = vmul.f32 %v684, %v1118
  %v1144 = vmul.f32 %v687, %v1118
  %v1145 = vmul.f32 %v689, %v1118
  %v1146 = vmul.f32 %v692, %v1118
  %v1147 = vmul.f32 %v694, %v1118
  %v1148 = vmul.f32 %v697, %v1118
  %v1149 = vmul.f32 %v699, %v1118
  %v1150 = vmul.f32 %v702, %v1118
  %v1151 = vmul.f32 %v704, %v1118
  %v1152 = vmul.f32 %v707, %v1118
  %v1153 = vmul.f32 %v709, %v1118
  %v1154 = vmul.f32 %v712, %v1118
  %v1155 = vmul.f32 %v714, %v1118
  %v1156 = vmul.f32 %v717, %v1118
  %v1157 = vmul.f32 %v719, %v1118
  %v1158 = vmul.f32 %v722, %v1118
  %v1159 = vmul.f32 %v724, %v1118
  %v1160 = vmul.f32 %v727, %v1118
  %v1161 = vmul.f32 %v729, %v1118
  %v1162 = vmul.f32 %v732, %v1118
  %v1163 = vmul.f32 %v734, %v1118
  %v1164 = vmul.f32 %v737, %v1118
  %v1165 = vmul.f32 %v739, %v1118
  %v1166 = vmul.f32 %v742, %v1118
  %v1167 = vmul.f32 %v744, %v1118
  %v1168 = vmul.f32 %v747, %v1118
  %v1169 = vmul.f32 %v749, %v1118
  %v1170 = vmul.f32 %v752, %v1118
  %v1171 = vmul.f32 %v754, %v1118
  %v1172 = vmul.f32 %v757, %v1118
  %v1173 = vmul.f32 %v759, %v1118
  %v1174 = vmul.f32 %v762, %v1118
  %v1175 = vmul.f32 %v764, %v1118
  %v1176 = vmul.f32 %v767, %v1118
  %v1177 = vmul.f32 %v769, %v1118
  %v1178 = vmul.f32 %v772, %v1118
  %v1179 = vmul.f32 %v774, %v1118
  %v1180 = vmul.f32 %v777, %v1118
  %v1181 = vmul.f32 %v779, %v1118
  %v1182 = vmul.f32 %v782, %v1118
  %v1183 = vmul.f32 %v784, %v1118
  %v1184 = vmul.f32 %v787, %v1118
  %v1185 = vmul.f32 %v789, %v1118
  %v1186 = vmul.f32 %v792, %v1118
  %v1187 = vmul.f32 %v794, %v1118
  %v1188 = vmul.f32 %v797, %v1118
  %v1189 = vmul.f32 %v799, %v1118
  %v1190 = vmul.f32 %v802, %v1118
  %v1191 = vmul.f32 %v804, %v1118
  %v1192 = vmul.f32 %v807, %v1118
  %v1193 = vmul.f32 %v809, %v1118
  %v1194 = vmul.f32 %v812, %v1118
  %v1195 = vmul.f32 %v814, %v1118
  %v1196 = vmul.f32 %v817, %v1118
  %v1197 = vmul.f32 %v819, %v1118
  %v1198 = vmul.f32 %v822, %v1118
  %v1199 = vmul.f32 %v824, %v1118
  %v1200 = vmul.f32 %v827, %v1118
  %v1201 = vmul.f32 %v829, %v1118
  %v1202 = vmul.f32 %v832, %v1118
  %v1203 = vmul.f32 %v834, %v1118
  %v1204 = vmul.f32 %v837, %v1118
  %v1205 = vmul.f32 %v839, %v1118
  %v1206 = vmul.f32 %v842, %v1118
  %v1207 = vmul.f32 %v844, %v1118
  %v1208 = vmul.f32 %v847, %v1118
  %v1209 = vmul.f32 %v849, %v1118
  %v1210 = vmul.f32 %v852, %v1118
  %v1211 = vmul.f32 %v854, %v1118
  %v1212 = vmul.f32 %v857, %v1118
  %v1213 = vmul.f32 %v859, %v1118
  %v1214 = vmul.f32 %v862, %v1118
  %v1215 = vmul.f32 %v864, %v1118
  %v1216 = vmul.f32 %v867, %v1118
  %v1217 = vmul.f32 %v869, %v1118
  %v1218 = vmul.f32 %v872, %v1118
  %v1219 = vmul.f32 %v874, %v1118
  %v1220 = vmul.f32 %v877, %v1118
  %v1221 = vmul.f32 %v879, %v1118
  %v1222 = vmul.f32 %v882, %v1118
  %v1223 = vmul.f32 %v884, %v1118
  %v1224 = vmul.f32 %v887, %v1118
  %v1225 = vmul.f32 %v889, %v1118
  %v1226 = vmul.f32 %v892, %v1118
  %v1227 = vmul.f32 %v894, %v1118
  %v1228 = vmul.f32 %v897, %v1118
  %v1229 = vmul.f32 %v899, %v1118
  %v1230 = vmul.f32 %v902, %v1118
  %v1231 = vmul.f32 %v904, %v1118
  %v1232 = vmul.f32 %v907, %v1118
  %v1233 = vmul.f32 %v909, %v1118
  %v1234 = vmul.f32 %v912, %v1118
  %v1235 = vmul.f32 %v914, %v1118
  %v1236 = vmul.f32 %v917, %v1118
  %v1237 = vmul.f32 %v919, %v1118
  %v1238 = vmul.f32 %v922, %v1118
  %v1239 = vmul.f32 %v924, %v1118
  %v1240 = vmul.f32 %v927, %v1118
  %v1241 = vmul.f32 %v929, %v1118
  %v1242 = vmul.f32 %v932, %v1118
  %v1243 = vmul.f32 %v934, %v1118
  %v1244 = vmul.f32 %v937, %v1118
  %v1245 = vmul.f32 %v939, %v1118
  %v1246 = vmul.f32 %v942, %v1118
  %v1247 = vmul.f32 %v944, %v1118
  %v1248 = vmul.f32 %v947, %v1118
  %v1249 = vmul.f32 %v949, %v1118
  %v1250 = vmul.f32 %v952, %v1118
  %v1251 = vmul.f32 %v954, %v1118
  %v1252 = vmul.f32 %v957, %v1118
  %v1253 = vmul.f32 %v959, %v1118
  %v1254 = vmul.f32 %v962, %v1118
  %v1255 = vmul.f32 %v964, %v1118
  %v1256 = vmul.f32 %v967, %v1118
  %v1257 = vmul.f32 %v969, %v1118
  %v1258 = vmul.f32 %v972, %v1118
  %v1259 = vmul.f32 %v974, %v1118
  %v1260 = vmul.f32 %v977, %v1118
  %v1261 = vmul.f32 %v979, %v1118
  %v1262 = vmul.f32 %v982, %v1118
  %v1263 = vmul.f32 %v984, %v1118
  %v1264 = vmul.f32 %v987, %v1118
  %v1265 = vmul.f32 %v989, %v1118
  %v1266 = vmul.f32 %v992, %v1118
  %v1267 = vmul.f32 %v994, %v1118
  %v1268 = vmul.f32 %v997, %v1118
  %v1269 = vmul.f32 %v999, %v1118
  %v1270 = vmul.f32 %v1002, %v1118
  %v1271 = vmul.f32 %v1004, %v1118
  %v1272 = vmul.f32 %v1007, %v1118
  %v1273 = vmul.f32 %v1009, %v1118
  %v1274 = vmul.f32 %v1012, %v1118
  %v1275 = vmul.f32 %v1014, %v1118
  %v1276 = vmul.f32 %v1017, %v1118
  %v1277 = vmul.f32 %v1019, %v1118
  %v1278 = vmul.f32 %v1022, %v1118
  %v1279 = vmul.f32 %v1024, %v1118
  %v1280 = vmul.f32 %v1027, %v1118
  %v1281 = vmul.f32 %v1029, %v1118
  %v1282 = vmul.f32 %v1032, %v1118
  %v1283 = vmul.f32 %v1034, %v1118
  %v1284 = vmul.f32 %v1037, %v1118
  %v1285 = vmul.f32 %v1039, %v1118
  %v1286 = vmul.f32 %v1042, %v1118
  %v1287 = vmul.f32 %v1044, %v1118
  %v1288 = vmul.f32 %v1047, %v1118
  %v1289 = vmul.f32 %v1049, %v1118
  %v1290 = vmul.f32 %v1052, %v1118
  %v1291 = vmul.f32 %v1054, %v1118
  %v1292 = vmul.f32 %v1057, %v1118
  %v1293 = vmul.f32 %v1059, %v1118
  %v1294 = vmul.f32 %v1062, %v1118
  %v1295 = vmul.f32 %v1064, %v1118
  %v1296 = vmul.f32 %v1067, %v1118
  %v1297 = vmul.f32 %v1069, %v1118
  %v1298 = vmul.f32 %v1072, %v1118
  %v1299 = vmul.f32 %v1074, %v1118
  %v1300 = vmul.f32 %v1077, %v1118
  %v1301 = vmul.f32 %v1079, %v1118
  %v1302 = vmul.f32 %v1082, %v1118
  %v1303 = vmul.f32 %v1084, %v1118
  %v1304 = vmul.f32 %v1087, %v1118
  %v1305 = vmul.f32 %v1089, %v1118
  %v1306 = vmul.f32 %v1092, %v1118
  %v1307 = vmul.f32 %v1094, %v1118
  %v1308 = vmul.f32 %v1097, %v1118
  %v1309 = vmul.f32 %v1099, %v1118
  %v1310 = vmul.f32 %v1102, %v1118
  %v1311 = vmul.f32 %v1104, %v1118
  %v1312 = vmul.f32 %v1107, %v1118
  %v1313 = vmul.f32 %v1109, %v1118
  %v1314 = vmul.f32 %v1112, %v1118
  %v1315 = vmul.f32 %v1114, %v1118
  %v1316 = vld [vmem:[%s3] sm:$0x1]
  %v1318 = vperm.slane %v1316, 0
  %v1320 = vadd.f32 %v1120, %v1318
  %v1321 = vadd.f32 %v1121, %v1318
  %v1322 = vadd.f32 %v1122, %v1318
  %v1323 = vadd.f32 %v1123, %v1318
  %v1324 = vadd.f32 %v1124, %v1318
  %v1325 = vadd.f32 %v1125, %v1318
  %v1326 = vadd.f32 %v1126, %v1318
  %v1327 = vadd.f32 %v1127, %v1318
  %v1328 = vadd.f32 %v1128, %v1318
  %v1329 = vadd.f32 %v1129, %v1318
  %v1330 = vadd.f32 %v1130, %v1318
  %v1331 = vadd.f32 %v1131, %v1318
  %v1332 = vadd.f32 %v1132, %v1318
  %v1333 = vadd.f32 %v1133, %v1318
  %v1334 = vadd.f32 %v1134, %v1318
  %v1335 = vadd.f32 %v1135, %v1318
  %v1336 = vadd.f32 %v1136, %v1318
  %v1337 = vadd.f32 %v1137, %v1318
  %v1338 = vadd.f32 %v1138, %v1318
  %v1339 = vadd.f32 %v1139, %v1318
  %v1340 = vadd.f32 %v1140, %v1318
  %v1341 = vadd.f32 %v1141, %v1318
  %v1342 = vadd.f32 %v1142, %v1318
  %v1343 = vadd.f32 %v1143, %v1318
  %v1344 = vadd.f32 %v1144, %v1318
  %v1345 = vadd.f32 %v1145, %v1318
  %v1346 = vadd.f32 %v1146, %v1318
  %v1347 = vadd.f32 %v1147, %v1318
  %v1348 = vadd.f32 %v1148, %v1318
  %v1349 = vadd.f32 %v1149, %v1318
  %v1350 = vadd.f32 %v1150, %v1318
  %v1351 = vadd.f32 %v1151, %v1318
  %v1352 = vadd.f32 %v1152, %v1318
  %v1353 = vadd.f32 %v1153, %v1318
  %v1354 = vadd.f32 %v1154, %v1318
  %v1355 = vadd.f32 %v1155, %v1318
  %v1356 = vadd.f32 %v1156, %v1318
  %v1357 = vadd.f32 %v1157, %v1318
  %v1358 = vadd.f32 %v1158, %v1318
  %v1359 = vadd.f32 %v1159, %v1318
  %v1360 = vadd.f32 %v1160, %v1318
  %v1361 = vadd.f32 %v1161, %v1318
  %v1362 = vadd.f32 %v1162, %v1318
  %v1363 = vadd.f32 %v1163, %v1318
  %v1364 = vadd.f32 %v1164, %v1318
  %v1365 = vadd.f32 %v1165, %v1318
  %v1366 = vadd.f32 %v1166, %v1318
  %v1367 = vadd.f32 %v1167, %v1318
  %v1368 = vadd.f32 %v1168, %v1318
  %v1369 = vadd.f32 %v1169, %v1318
  %v1370 = vadd.f32 %v1170, %v1318
  %v1371 = vadd.f32 %v1171, %v1318
  %v1372 = vadd.f32 %v1172, %v1318
  %v1373 = vadd.f32 %v1173, %v1318
  %v1374 = vadd.f32 %v1174, %v1318
  %v1375 = vadd.f32 %v1175, %v1318
  %v1376 = vadd.f32 %v1176, %v1318
  %v1377 = vadd.f32 %v1177, %v1318
  %v1378 = vadd.f32 %v1178, %v1318
  %v1379 = vadd.f32 %v1179, %v1318
  %v1380 = vadd.f32 %v1180, %v1318
  %v1381 = vadd.f32 %v1181, %v1318
  %v1382 = vadd.f32 %v1182, %v1318
  %v1383 = vadd.f32 %v1183, %v1318
  %v1384 = vadd.f32 %v1184, %v1318
  %v1385 = vadd.f32 %v1185, %v1318
  %v1386 = vadd.f32 %v1186, %v1318
  %v1387 = vadd.f32 %v1187, %v1318
  %v1388 = vadd.f32 %v1188, %v1318
  %v1389 = vadd.f32 %v1189, %v1318
  %v1390 = vadd.f32 %v1190, %v1318
  %v1391 = vadd.f32 %v1191, %v1318
  %v1392 = vadd.f32 %v1192, %v1318
  %v1393 = vadd.f32 %v1193, %v1318
  %v1394 = vadd.f32 %v1194, %v1318
  %v1395 = vadd.f32 %v1195, %v1318
  %v1396 = vadd.f32 %v1196, %v1318
  %v1397 = vadd.f32 %v1197, %v1318
  %v1398 = vadd.f32 %v1198, %v1318
  %v1399 = vadd.f32 %v1199, %v1318
  %v1400 = vadd.f32 %v1200, %v1318
  %v1401 = vadd.f32 %v1201, %v1318
  %v1402 = vadd.f32 %v1202, %v1318
  %v1403 = vadd.f32 %v1203, %v1318
  %v1404 = vadd.f32 %v1204, %v1318
  %v1405 = vadd.f32 %v1205, %v1318
  %v1406 = vadd.f32 %v1206, %v1318
  %v1407 = vadd.f32 %v1207, %v1318
  %v1408 = vadd.f32 %v1208, %v1318
  %v1409 = vadd.f32 %v1209, %v1318
  %v1410 = vadd.f32 %v1210, %v1318
  %v1411 = vadd.f32 %v1211, %v1318
  %v1412 = vadd.f32 %v1212, %v1318
  %v1413 = vadd.f32 %v1213, %v1318
  %v1414 = vadd.f32 %v1214, %v1318
  %v1415 = vadd.f32 %v1215, %v1318
  %v1416 = vadd.f32 %v1216, %v1318
  %v1417 = vadd.f32 %v1217, %v1318
  %v1418 = vadd.f32 %v1218, %v1318
  %v1419 = vadd.f32 %v1219, %v1318
  %v1420 = vadd.f32 %v1220, %v1318
  %v1421 = vadd.f32 %v1221, %v1318
  %v1422 = vadd.f32 %v1222, %v1318
  %v1423 = vadd.f32 %v1223, %v1318
  %v1424 = vadd.f32 %v1224, %v1318
  %v1425 = vadd.f32 %v1225, %v1318
  %v1426 = vadd.f32 %v1226, %v1318
  %v1427 = vadd.f32 %v1227, %v1318
  %v1428 = vadd.f32 %v1228, %v1318
  %v1429 = vadd.f32 %v1229, %v1318
  %v1430 = vadd.f32 %v1230, %v1318
  %v1431 = vadd.f32 %v1231, %v1318
  %v1432 = vadd.f32 %v1232, %v1318
  %v1433 = vadd.f32 %v1233, %v1318
  %v1434 = vadd.f32 %v1234, %v1318
  %v1435 = vadd.f32 %v1235, %v1318
  %v1436 = vadd.f32 %v1236, %v1318
  %v1437 = vadd.f32 %v1237, %v1318
  %v1438 = vadd.f32 %v1238, %v1318
  %v1439 = vadd.f32 %v1239, %v1318
  %v1440 = vadd.f32 %v1240, %v1318
  %v1441 = vadd.f32 %v1241, %v1318
  %v1442 = vadd.f32 %v1242, %v1318
  %v1443 = vadd.f32 %v1243, %v1318
  %v1444 = vadd.f32 %v1244, %v1318
  %v1445 = vadd.f32 %v1245, %v1318
  %v1446 = vadd.f32 %v1246, %v1318
  %v1447 = vadd.f32 %v1247, %v1318
  %v1448 = vadd.f32 %v1248, %v1318
  %v1449 = vadd.f32 %v1249, %v1318
  %v1450 = vadd.f32 %v1250, %v1318
  %v1451 = vadd.f32 %v1251, %v1318
  %v1452 = vadd.f32 %v1252, %v1318
  %v1453 = vadd.f32 %v1253, %v1318
  %v1454 = vadd.f32 %v1254, %v1318
  %v1455 = vadd.f32 %v1255, %v1318
  %v1456 = vadd.f32 %v1256, %v1318
  %v1457 = vadd.f32 %v1257, %v1318
  %v1458 = vadd.f32 %v1258, %v1318
  %v1459 = vadd.f32 %v1259, %v1318
  %v1460 = vadd.f32 %v1260, %v1318
  %v1461 = vadd.f32 %v1261, %v1318
  %v1462 = vadd.f32 %v1262, %v1318
  %v1463 = vadd.f32 %v1263, %v1318
  %v1464 = vadd.f32 %v1264, %v1318
  %v1465 = vadd.f32 %v1265, %v1318
  %v1466 = vadd.f32 %v1266, %v1318
  %v1467 = vadd.f32 %v1267, %v1318
  %v1468 = vadd.f32 %v1268, %v1318
  %v1469 = vadd.f32 %v1269, %v1318
  %v1470 = vadd.f32 %v1270, %v1318
  %v1471 = vadd.f32 %v1271, %v1318
  %v1472 = vadd.f32 %v1272, %v1318
  %v1473 = vadd.f32 %v1273, %v1318
  %v1474 = vadd.f32 %v1274, %v1318
  %v1475 = vadd.f32 %v1275, %v1318
  %v1476 = vadd.f32 %v1276, %v1318
  %v1477 = vadd.f32 %v1277, %v1318
  %v1478 = vadd.f32 %v1278, %v1318
  %v1479 = vadd.f32 %v1279, %v1318
  %v1480 = vadd.f32 %v1280, %v1318
  %v1481 = vadd.f32 %v1281, %v1318
  %v1482 = vadd.f32 %v1282, %v1318
  %v1483 = vadd.f32 %v1283, %v1318
  %v1484 = vadd.f32 %v1284, %v1318
  %v1485 = vadd.f32 %v1285, %v1318
  %v1486 = vadd.f32 %v1286, %v1318
  %v1487 = vadd.f32 %v1287, %v1318
  %v1488 = vadd.f32 %v1288, %v1318
  %v1489 = vadd.f32 %v1289, %v1318
  %v1490 = vadd.f32 %v1290, %v1318
  %v1491 = vadd.f32 %v1291, %v1318
  %v1492 = vadd.f32 %v1292, %v1318
  %v1493 = vadd.f32 %v1293, %v1318
  %v1494 = vadd.f32 %v1294, %v1318
  %v1495 = vadd.f32 %v1295, %v1318
  %v1496 = vadd.f32 %v1296, %v1318
  %v1497 = vadd.f32 %v1297, %v1318
  %v1498 = vadd.f32 %v1298, %v1318
  %v1499 = vadd.f32 %v1299, %v1318
  %v1500 = vadd.f32 %v1300, %v1318
  %v1501 = vadd.f32 %v1301, %v1318
  %v1502 = vadd.f32 %v1302, %v1318
  %v1503 = vadd.f32 %v1303, %v1318
  %v1504 = vadd.f32 %v1304, %v1318
  %v1505 = vadd.f32 %v1305, %v1318
  %v1506 = vadd.f32 %v1306, %v1318
  %v1507 = vadd.f32 %v1307, %v1318
  %v1508 = vadd.f32 %v1308, %v1318
  %v1509 = vadd.f32 %v1309, %v1318
  %v1510 = vadd.f32 %v1310, %v1318
  %v1511 = vadd.f32 %v1311, %v1318
  %v1512 = vadd.f32 %v1312, %v1318
  %v1513 = vadd.f32 %v1313, %v1318
  %v1514 = vadd.f32 %v1314, %v1318
  %v1515 = vadd.f32 %v1315, %v1318
  %vm1516 = vcmask 261120
  %1517 = vst.msk [vmem:[%s4] sm:$0xff] %vm1516, %v1320
  %1518 = vst.msk [vmem:[%s4 + $0x8] sm:$0xff] %vm1516, %v1321
  %1519 = vst.msk [vmem:[%s4 + $0x10] sm:$0xff] %vm1516, %v1322
  %1520 = vst.msk [vmem:[%s4 + $0x18] sm:$0xff] %vm1516, %v1323
  %1521 = vst.msk [vmem:[%s4 + $0x20] sm:$0xff] %vm1516, %v1324
  %1522 = vst.msk [vmem:[%s4 + $0x28] sm:$0xff] %vm1516, %v1325
  %1523 = vst.msk [vmem:[%s4 + $0x30] sm:$0xff] %vm1516, %v1326
  %1524 = vst.msk [vmem:[%s4 + $0x38] sm:$0xff] %vm1516, %v1327
  %1525 = vst.msk [vmem:[%s4 + $0x40] sm:$0xff] %vm1516, %v1328
  %1526 = vst.msk [vmem:[%s4 + $0x48] sm:$0xff] %vm1516, %v1329
  %1527 = vst.msk [vmem:[%s4 + $0x50] sm:$0xff] %vm1516, %v1330
  %1528 = vst.msk [vmem:[%s4 + $0x58] sm:$0xff] %vm1516, %v1331
  %1529 = vst.msk [vmem:[%s4 + $0x60] sm:$0xff] %vm1516, %v1332
  %1530 = vst.msk [vmem:[%s4 + $0x68] sm:$0xff] %vm1516, %v1333
  %1531 = vst.msk [vmem:[%s4 + $0x70] sm:$0xff] %vm1516, %v1334
  %1532 = vst.msk [vmem:[%s4 + $0x78] sm:$0xff] %vm1516, %v1335
  %1533 = vst.msk [vmem:[%s4 + $0x80] sm:$0xff] %vm1516, %v1336
  %1534 = vst.msk [vmem:[%s4 + $0x88] sm:$0xff] %vm1516, %v1337
  %1535 = vst.msk [vmem:[%s4 + $0x90] sm:$0xff] %vm1516, %v1338
  %1536 = vst.msk [vmem:[%s4 + $0x98] sm:$0xff] %vm1516, %v1339
  %1537 = vst.msk [vmem:[%s4 + $0xa0] sm:$0xff] %vm1516, %v1340
  %1538 = vst.msk [vmem:[%s4 + $0xa8] sm:$0xff] %vm1516, %v1341
  %1539 = vst.msk [vmem:[%s4 + $0xb0] sm:$0xff] %vm1516, %v1342
  %1540 = vst.msk [vmem:[%s4 + $0xb8] sm:$0xff] %vm1516, %v1343
  %1541 = vst.msk [vmem:[%s4 + $0xc0] sm:$0xff] %vm1516, %v1344
  %1542 = vst.msk [vmem:[%s4 + $0xc8] sm:$0xff] %vm1516, %v1345
  %1543 = vst.msk [vmem:[%s4 + $0xd0] sm:$0xff] %vm1516, %v1346
  %1544 = vst.msk [vmem:[%s4 + $0xd8] sm:$0xff] %vm1516, %v1347
  %1545 = vst.msk [vmem:[%s4 + $0xe0] sm:$0xff] %vm1516, %v1348
  %1546 = vst.msk [vmem:[%s4 + $0xe8] sm:$0xff] %vm1516, %v1349
  %1547 = vst.msk [vmem:[%s4 + $0xf0] sm:$0xff] %vm1516, %v1350
  %1548 = vst.msk [vmem:[%s4 + $0xf8] sm:$0xff] %vm1516, %v1351
  %1549 = vst.msk [vmem:[%s4 + $0x100] sm:$0xff] %vm1516, %v1352
  %1550 = vst.msk [vmem:[%s4 + $0x108] sm:$0xff] %vm1516, %v1353
  %1551 = vst.msk [vmem:[%s4 + $0x110] sm:$0xff] %vm1516, %v1354
  %1552 = vst.msk [vmem:[%s4 + $0x118] sm:$0xff] %vm1516, %v1355
  %1553 = vst.msk [vmem:[%s4 + $0x120] sm:$0xff] %vm1516, %v1356
  %1554 = vst.msk [vmem:[%s4 + $0x128] sm:$0xff] %vm1516, %v1357
  %1555 = vst.msk [vmem:[%s4 + $0x130] sm:$0xff] %vm1516, %v1358
  %1556 = vst.msk [vmem:[%s4 + $0x138] sm:$0xff] %vm1516, %v1359
  %1557 = vst.msk [vmem:[%s4 + $0x140] sm:$0xff] %vm1516, %v1360
  %1558 = vst.msk [vmem:[%s4 + $0x148] sm:$0xff] %vm1516, %v1361
  %1559 = vst.msk [vmem:[%s4 + $0x150] sm:$0xff] %vm1516, %v1362
  %1560 = vst.msk [vmem:[%s4 + $0x158] sm:$0xff] %vm1516, %v1363
  %1561 = vst.msk [vmem:[%s4 + $0x160] sm:$0xff] %vm1516, %v1364
  %1562 = vst.msk [vmem:[%s4 + $0x168] sm:$0xff] %vm1516, %v1365
  %1563 = vst.msk [vmem:[%s4 + $0x170] sm:$0xff] %vm1516, %v1366
  %1564 = vst.msk [vmem:[%s4 + $0x178] sm:$0xff] %vm1516, %v1367
  %1565 = vst.msk [vmem:[%s4 + $0x180] sm:$0xff] %vm1516, %v1368
  %1566 = vst.msk [vmem:[%s4 + $0x188] sm:$0xff] %vm1516, %v1369
  %1567 = vst.msk [vmem:[%s4 + $0x190] sm:$0xff] %vm1516, %v1370
  %1568 = vst.msk [vmem:[%s4 + $0x198] sm:$0xff] %vm1516, %v1371
  %1569 = vst.msk [vmem:[%s4 + $0x1a0] sm:$0xff] %vm1516, %v1372
  %1570 = vst.msk [vmem:[%s4 + $0x1a8] sm:$0xff] %vm1516, %v1373
  %1571 = vst.msk [vmem:[%s4 + $0x1b0] sm:$0xff] %vm1516, %v1374
  %1572 = vst.msk [vmem:[%s4 + $0x1b8] sm:$0xff] %vm1516, %v1375
  %1573 = vst.msk [vmem:[%s4 + $0x1c0] sm:$0xff] %vm1516, %v1376
  %1574 = vst.msk [vmem:[%s4 + $0x1c8] sm:$0xff] %vm1516, %v1377
  %1575 = vst.msk [vmem:[%s4 + $0x1d0] sm:$0xff] %vm1516, %v1378
  %1576 = vst.msk [vmem:[%s4 + $0x1d8] sm:$0xff] %vm1516, %v1379
  %1577 = vst.msk [vmem:[%s4 + $0x1e0] sm:$0xff] %vm1516, %v1380
  %1578 = vst.msk [vmem:[%s4 + $0x1e8] sm:$0xff] %vm1516, %v1381
  %1579 = vst.msk [vmem:[%s4 + $0x1f0] sm:$0xff] %vm1516, %v1382
  %1580 = vst.msk [vmem:[%s4 + $0x1f8] sm:$0xff] %vm1516, %v1383
  %1581 = vst.msk [vmem:[%s4 + $0x200] sm:$0xff] %vm1516, %v1384
  %1582 = vst.msk [vmem:[%s4 + $0x208] sm:$0xff] %vm1516, %v1385
  %1583 = vst.msk [vmem:[%s4 + $0x210] sm:$0xff] %vm1516, %v1386
  %1584 = vst.msk [vmem:[%s4 + $0x218] sm:$0xff] %vm1516, %v1387
  %1585 = vst.msk [vmem:[%s4 + $0x220] sm:$0xff] %vm1516, %v1388
  %1586 = vst.msk [vmem:[%s4 + $0x228] sm:$0xff] %vm1516, %v1389
  %1587 = vst.msk [vmem:[%s4 + $0x230] sm:$0xff] %vm1516, %v1390
  %1588 = vst.msk [vmem:[%s4 + $0x238] sm:$0xff] %vm1516, %v1391
  %1589 = vst.msk [vmem:[%s4 + $0x240] sm:$0xff] %vm1516, %v1392
  %1590 = vst.msk [vmem:[%s4 + $0x248] sm:$0xff] %vm1516, %v1393
  %1591 = vst.msk [vmem:[%s4 + $0x250] sm:$0xff] %vm1516, %v1394
  %1592 = vst.msk [vmem:[%s4 + $0x258] sm:$0xff] %vm1516, %v1395
  %1593 = vst.msk [vmem:[%s4 + $0x260] sm:$0xff] %vm1516, %v1396
  %1594 = vst.msk [vmem:[%s4 + $0x268] sm:$0xff] %vm1516, %v1397
  %1595 = vst.msk [vmem:[%s4 + $0x270] sm:$0xff] %vm1516, %v1398
  %1596 = vst.msk [vmem:[%s4 + $0x278] sm:$0xff] %vm1516, %v1399
  %1597 = vst.msk [vmem:[%s4 + $0x280] sm:$0xff] %vm1516, %v1400
  %1598 = vst.msk [vmem:[%s4 + $0x288] sm:$0xff] %vm1516, %v1401
  %1599 = vst.msk [vmem:[%s4 + $0x290] sm:$0xff] %vm1516, %v1402
  %1600 = vst.msk [vmem:[%s4 + $0x298] sm:$0xff] %vm1516, %v1403
  %1601 = vst.msk [vmem:[%s4 + $0x2a0] sm:$0xff] %vm1516, %v1404
  %1602 = vst.msk [vmem:[%s4 + $0x2a8] sm:$0xff] %vm1516, %v1405
  %1603 = vst.msk [vmem:[%s4 + $0x2b0] sm:$0xff] %vm1516, %v1406
  %1604 = vst.msk [vmem:[%s4 + $0x2b8] sm:$0xff] %vm1516, %v1407
  %1605 = vst.msk [vmem:[%s4 + $0x2c0] sm:$0xff] %vm1516, %v1408
  %1606 = vst.msk [vmem:[%s4 + $0x2c8] sm:$0xff] %vm1516, %v1409
  %1607 = vst.msk [vmem:[%s4 + $0x2d0] sm:$0xff] %vm1516, %v1410
  %1608 = vst.msk [vmem:[%s4 + $0x2d8] sm:$0xff] %vm1516, %v1411
  %1609 = vst.msk [vmem:[%s4 + $0x2e0] sm:$0xff] %vm1516, %v1412
  %1610 = vst.msk [vmem:[%s4 + $0x2e8] sm:$0xff] %vm1516, %v1413
  %1611 = vst.msk [vmem:[%s4 + $0x2f0] sm:$0xff] %vm1516, %v1414
  %1612 = vst.msk [vmem:[%s4 + $0x2f8] sm:$0xff] %vm1516, %v1415
  %1613 = vst.msk [vmem:[%s4 + $0x300] sm:$0xff] %vm1516, %v1416
  %1614 = vst.msk [vmem:[%s4 + $0x308] sm:$0xff] %vm1516, %v1417
  %1615 = vst.msk [vmem:[%s4 + $0x310] sm:$0xff] %vm1516, %v1418
  %1616 = vst.msk [vmem:[%s4 + $0x318] sm:$0xff] %vm1516, %v1419
  %1617 = vst.msk [vmem:[%s4 + $0x320] sm:$0xff] %vm1516, %v1420
  %1618 = vst.msk [vmem:[%s4 + $0x328] sm:$0xff] %vm1516, %v1421
  %1619 = vst.msk [vmem:[%s4 + $0x330] sm:$0xff] %vm1516, %v1422
  %1620 = vst.msk [vmem:[%s4 + $0x338] sm:$0xff] %vm1516, %v1423
  %1621 = vst.msk [vmem:[%s4 + $0x340] sm:$0xff] %vm1516, %v1424
  %1622 = vst.msk [vmem:[%s4 + $0x348] sm:$0xff] %vm1516, %v1425
  %1623 = vst.msk [vmem:[%s4 + $0x350] sm:$0xff] %vm1516, %v1426
  %1624 = vst.msk [vmem:[%s4 + $0x358] sm:$0xff] %vm1516, %v1427
  %1625 = vst.msk [vmem:[%s4 + $0x360] sm:$0xff] %vm1516, %v1428
  %1626 = vst.msk [vmem:[%s4 + $0x368] sm:$0xff] %vm1516, %v1429
  %1627 = vst.msk [vmem:[%s4 + $0x370] sm:$0xff] %vm1516, %v1430
  %1628 = vst.msk [vmem:[%s4 + $0x378] sm:$0xff] %vm1516, %v1431
  %1629 = vst.msk [vmem:[%s4 + $0x380] sm:$0xff] %vm1516, %v1432
  %1630 = vst.msk [vmem:[%s4 + $0x388] sm:$0xff] %vm1516, %v1433
  %1631 = vst.msk [vmem:[%s4 + $0x390] sm:$0xff] %vm1516, %v1434
  %1632 = vst.msk [vmem:[%s4 + $0x398] sm:$0xff] %vm1516, %v1435
  %1633 = vst.msk [vmem:[%s4 + $0x3a0] sm:$0xff] %vm1516, %v1436
  %1634 = vst.msk [vmem:[%s4 + $0x3a8] sm:$0xff] %vm1516, %v1437
  %1635 = vst.msk [vmem:[%s4 + $0x3b0] sm:$0xff] %vm1516, %v1438
  %1636 = vst.msk [vmem:[%s4 + $0x3b8] sm:$0xff] %vm1516, %v1439
  %1637 = vst.msk [vmem:[%s4 + $0x3c0] sm:$0xff] %vm1516, %v1440
  %1638 = vst.msk [vmem:[%s4 + $0x3c8] sm:$0xff] %vm1516, %v1441
  %1639 = vst.msk [vmem:[%s4 + $0x3d0] sm:$0xff] %vm1516, %v1442
  %1640 = vst.msk [vmem:[%s4 + $0x3d8] sm:$0xff] %vm1516, %v1443
  %1641 = vst.msk [vmem:[%s4 + $0x3e0] sm:$0xff] %vm1516, %v1444
  %1642 = vst.msk [vmem:[%s4 + $0x3e8] sm:$0xff] %vm1516, %v1445
  %1643 = vst.msk [vmem:[%s4 + $0x3f0] sm:$0xff] %vm1516, %v1446
  %1644 = vst.msk [vmem:[%s4 + $0x3f8] sm:$0xff] %vm1516, %v1447
  %1645 = vst.msk [vmem:[%s4 + $0x400] sm:$0xff] %vm1516, %v1448
  %1646 = vst.msk [vmem:[%s4 + $0x408] sm:$0xff] %vm1516, %v1449
  %1647 = vst.msk [vmem:[%s4 + $0x410] sm:$0xff] %vm1516, %v1450
  %1648 = vst.msk [vmem:[%s4 + $0x418] sm:$0xff] %vm1516, %v1451
  %1649 = vst.msk [vmem:[%s4 + $0x420] sm:$0xff] %vm1516, %v1452
  %1650 = vst.msk [vmem:[%s4 + $0x428] sm:$0xff] %vm1516, %v1453
  %1651 = vst.msk [vmem:[%s4 + $0x430] sm:$0xff] %vm1516, %v1454
  %1652 = vst.msk [vmem:[%s4 + $0x438] sm:$0xff] %vm1516, %v1455
  %1653 = vst.msk [vmem:[%s4 + $0x440] sm:$0xff] %vm1516, %v1456
  %1654 = vst.msk [vmem:[%s4 + $0x448] sm:$0xff] %vm1516, %v1457
  %1655 = vst.msk [vmem:[%s4 + $0x450] sm:$0xff] %vm1516, %v1458
  %1656 = vst.msk [vmem:[%s4 + $0x458] sm:$0xff] %vm1516, %v1459
  %1657 = vst.msk [vmem:[%s4 + $0x460] sm:$0xff] %vm1516, %v1460
  %1658 = vst.msk [vmem:[%s4 + $0x468] sm:$0xff] %vm1516, %v1461
  %1659 = vst.msk [vmem:[%s4 + $0x470] sm:$0xff] %vm1516, %v1462
  %1660 = vst.msk [vmem:[%s4 + $0x478] sm:$0xff] %vm1516, %v1463
  %1661 = vst.msk [vmem:[%s4 + $0x480] sm:$0xff] %vm1516, %v1464
  %1662 = vst.msk [vmem:[%s4 + $0x488] sm:$0xff] %vm1516, %v1465
  %1663 = vst.msk [vmem:[%s4 + $0x490] sm:$0xff] %vm1516, %v1466
  %1664 = vst.msk [vmem:[%s4 + $0x498] sm:$0xff] %vm1516, %v1467
  %1665 = vst.msk [vmem:[%s4 + $0x4a0] sm:$0xff] %vm1516, %v1468
  %1666 = vst.msk [vmem:[%s4 + $0x4a8] sm:$0xff] %vm1516, %v1469
  %1667 = vst.msk [vmem:[%s4 + $0x4b0] sm:$0xff] %vm1516, %v1470
  %1668 = vst.msk [vmem:[%s4 + $0x4b8] sm:$0xff] %vm1516, %v1471
  %1669 = vst.msk [vmem:[%s4 + $0x4c0] sm:$0xff] %vm1516, %v1472
  %1670 = vst.msk [vmem:[%s4 + $0x4c8] sm:$0xff] %vm1516, %v1473
  %1671 = vst.msk [vmem:[%s4 + $0x4d0] sm:$0xff] %vm1516, %v1474
  %1672 = vst.msk [vmem:[%s4 + $0x4d8] sm:$0xff] %vm1516, %v1475
  %1673 = vst.msk [vmem:[%s4 + $0x4e0] sm:$0xff] %vm1516, %v1476
  %1674 = vst.msk [vmem:[%s4 + $0x4e8] sm:$0xff] %vm1516, %v1477
  %1675 = vst.msk [vmem:[%s4 + $0x4f0] sm:$0xff] %vm1516, %v1478
  %1676 = vst.msk [vmem:[%s4 + $0x4f8] sm:$0xff] %vm1516, %v1479
  %1677 = vst.msk [vmem:[%s4 + $0x500] sm:$0xff] %vm1516, %v1480
  %1678 = vst.msk [vmem:[%s4 + $0x508] sm:$0xff] %vm1516, %v1481
  %1679 = vst.msk [vmem:[%s4 + $0x510] sm:$0xff] %vm1516, %v1482
  %1680 = vst.msk [vmem:[%s4 + $0x518] sm:$0xff] %vm1516, %v1483
  %1681 = vst.msk [vmem:[%s4 + $0x520] sm:$0xff] %vm1516, %v1484
  %1682 = vst.msk [vmem:[%s4 + $0x528] sm:$0xff] %vm1516, %v1485
  %1683 = vst.msk [vmem:[%s4 + $0x530] sm:$0xff] %vm1516, %v1486
  %1684 = vst.msk [vmem:[%s4 + $0x538] sm:$0xff] %vm1516, %v1487
  %1685 = vst.msk [vmem:[%s4 + $0x540] sm:$0xff] %vm1516, %v1488
  %1686 = vst.msk [vmem:[%s4 + $0x548] sm:$0xff] %vm1516, %v1489
  %1687 = vst.msk [vmem:[%s4 + $0x550] sm:$0xff] %vm1516, %v1490
  %1688 = vst.msk [vmem:[%s4 + $0x558] sm:$0xff] %vm1516, %v1491
  %1689 = vst.msk [vmem:[%s4 + $0x560] sm:$0xff] %vm1516, %v1492
  %1690 = vst.msk [vmem:[%s4 + $0x568] sm:$0xff] %vm1516, %v1493
  %1691 = vst.msk [vmem:[%s4 + $0x570] sm:$0xff] %vm1516, %v1494
  %1692 = vst.msk [vmem:[%s4 + $0x578] sm:$0xff] %vm1516, %v1495
  %1693 = vst.msk [vmem:[%s4 + $0x580] sm:$0xff] %vm1516, %v1496
  %1694 = vst.msk [vmem:[%s4 + $0x588] sm:$0xff] %vm1516, %v1497
  %1695 = vst.msk [vmem:[%s4 + $0x590] sm:$0xff] %vm1516, %v1498
  %1696 = vst.msk [vmem:[%s4 + $0x598] sm:$0xff] %vm1516, %v1499
  %1697 = vst.msk [vmem:[%s4 + $0x5a0] sm:$0xff] %vm1516, %v1500
  %1698 = vst.msk [vmem:[%s4 + $0x5a8] sm:$0xff] %vm1516, %v1501
  %1699 = vst.msk [vmem:[%s4 + $0x5b0] sm:$0xff] %vm1516, %v1502
  %1700 = vst.msk [vmem:[%s4 + $0x5b8] sm:$0xff] %vm1516, %v1503
  %1701 = vst.msk [vmem:[%s4 + $0x5c0] sm:$0xff] %vm1516, %v1504
  %1702 = vst.msk [vmem:[%s4 + $0x5c8] sm:$0xff] %vm1516, %v1505
  %1703 = vst.msk [vmem:[%s4 + $0x5d0] sm:$0xff] %vm1516, %v1506
  %1704 = vst.msk [vmem:[%s4 + $0x5d8] sm:$0xff] %vm1516, %v1507
  %1705 = vst.msk [vmem:[%s4 + $0x5e0] sm:$0xff] %vm1516, %v1508
  %1706 = vst.msk [vmem:[%s4 + $0x5e8] sm:$0xff] %vm1516, %v1509
  %1707 = vst.msk [vmem:[%s4 + $0x5f0] sm:$0xff] %vm1516, %v1510
  %1708 = vst.msk [vmem:[%s4 + $0x5f8] sm:$0xff] %vm1516, %v1511
  %1709 = vst.msk [vmem:[%s4 + $0x600] sm:$0xff] %vm1516, %v1512
  %1710 = vst.msk [vmem:[%s4 + $0x608] sm:$0xff] %vm1516, %v1513
  %1711 = vst.msk [vmem:[%s4 + $0x610] sm:$0xff] %vm1516, %v1514
  %1712 = vst.msk [vmem:[%s4 + $0x618] sm:$0xff] %vm1516, %v1515
  // Predicated region
  $region18: #{tpu_custom_call.1} parent=0 // pred_check
    _
  $region19: #{tpu_custom_call.1} parent=0 // pred_check_branch
    %1714 = sbr.rel (0) target = $region21
  $region20: #{tpu_custom_call.1} parent=0 // pred_region
    _
  $region21: #{tpu_custom_call.1} parent=0 // pred_fallthru
    _
  // Predicated region
  $region22: #{tpu_custom_call.1} parent=0 // pred_check
    _
  $region23: #{tpu_custom_call.1} parent=0 // pred_check_branch
    %1716 = sbr.rel (0) target = $region25
  $region24: #{tpu_custom_call.1} parent=0 // pred_region
    _
  $region25: #{tpu_custom_call.1} parent=0 // pred_fallthru
    _

</llo_original>
